<compile_context>
chip_gen: v7x
topology: tpu7x:2x2x1
jax: 0.10.0
libtpu: 0.0.40
codegen_flags: <defaults>
</compile_context>

<pallas_src>
import jax
import jax.numpy as jnp
from jax.experimental import pallas as pl
from jax.experimental.pallas import tpu as pltpu

# ---- model hyperparameters (synthetic, small, matching the torch module) ----
CONTEXT_SIZE = 3
EMBEDDING_DIM = 32
VOCAB_SIZE = 256
HIDDEN = 128
IN_FEATURES = CONTEXT_SIZE * EMBEDDING_DIM  # 96
STACKED_K = CONTEXT_SIZE * VOCAB_SIZE       # 768


def _round_up(x, m):
    return (x + m - 1) // m * m


def _fused_lm_kernel(idx_ref, w1e_ref, b1_ref, w2_ref, b2_ref, o_ref):
    """One batch tile: (embedding ∘ fc1) via stacked one-hot matmul + ReLU + fc2.

    idx_ref: (TB, C)          int32  token indices
    w1e_ref: (C*V, H)=(768,128) bf16 folded embedding@fc1 weight
    b1_ref:  (1, H)           f32
    w2_ref:  (H, V)           bf16
    b2_ref:  (1, V)           f32
    o_ref:   (TB, V)          bf16/f32 logits
    """
    idx = idx_ref[...]                                     # (TB, C) int32
    tb = idx.shape[0]

    # Stacked one-hot over the 3 disjoint 256-lane ranges, built directly in
    # bf16 from the int32 compares (no f32 select + convert pass).
    lanes = jax.lax.broadcasted_iota(jnp.int32, (tb, STACKED_K), 1)
    hit = lanes == idx[:, 0:1]
    for c in range(1, CONTEXT_SIZE):                       # unrolled (3 positions)
        hit = hit | (lanes == (idx[:, c:c + 1] + c * VOCAB_SIZE))
    onehot = hit.astype(w1e_ref.dtype)                     # (TB, 768) bf16

    # Single clean K=768 / N=128 MXU pass: h = sum_c W1eff[c, idx[:,c], :]
    h = jnp.dot(onehot, w1e_ref[...],
                preferred_element_type=jnp.float32)        # (TB, 128) f32
    h = jnp.maximum(h + b1_ref[...], 0.0)                  # bias + ReLU (VPU, f32)
    # TODO(synk): dropout(p=0.2) is identity here (inference); training-mode
    # masking would use pltpu.prng_seed + pltpu.stateful_bernoulli + 1/(1-p).
    out = jnp.dot(h.astype(w2_ref.dtype), w2_ref[...],
                  preferred_element_type=jnp.float32) + b2_ref[...]
    o_ref[...] = out.astype(o_ref.dtype)


def prepare_kernel_params(params):
    """Convert f32 master params into the kernel layout.

    The embedding is folded into fc1:
      W1eff[c] = emb (V, D) @ w1[c] (D, H)  ->  (C, V, H), stacked to (C*V, H)
    stored bf16 (V as the contraction/K axis, H as lanes -- the layout that maps
    to full MXU tiles on v5e's 128-deep MXU as well as v6e/v7x)."""
    w1 = params["w1"].reshape(CONTEXT_SIZE, EMBEDDING_DIM, HIDDEN)          # (C, D, H)
    w1eff = jnp.einsum("vd,cdh->cvh", params["embedding"], w1)              # (C, V, H) f32
    w1eff = w1eff.reshape(STACKED_K, HIDDEN).astype(jnp.bfloat16)           # (768, 128)
    return {
        "w1eff": w1eff,
        "b1": params["b1"].astype(jnp.float32),
        "w2": params["w2"].astype(jnp.bfloat16),
        "b2": params["b2"].astype(jnp.float32),
    }


def _select_tile_b(B):
    """Pick a batch tile: >=128 rows for the MXU, >=4 grid steps when B allows
    (>=2 pipelined steps per TensorCore on v7x), capped at 512; multiple of 16
    so bf16 output tiles stay sublane-aligned."""
    if B <= 128:
        return _round_up(max(B, 16), 16)
    return int(min(512, max(128, _round_up(pl.cdiv(B, 4), 128))))


def neural_lm_forward(x_idx, kparams, *, tile_b=None, out_dtype=jnp.bfloat16):
    """x_idx: (B, CONTEXT_SIZE) int32 token indices -> logits (B, VOCAB_SIZE)."""
    B = x_idx.shape[0]

    if tile_b is None:
        tile_b = _select_tile_b(B)
    else:
        tile_b = max(16, _round_up(min(tile_b, B), 16))
    Bp = _round_up(B, tile_b)
    if Bp != B:
        # Padded rows use token 0; their logits are sliced off below.
        x_idx = jnp.pad(x_idx, ((0, Bp - B), (0, 0)))

    grid = (Bp // tile_b,)

    out_bytes = jnp.dtype(out_dtype).itemsize
    flops = 2 * Bp * (STACKED_K * HIDDEN + HIDDEN * VOCAB_SIZE)
    weight_bytes = (kparams["w1eff"].size * 2 + kparams["w2"].size * 2
                    + kparams["b1"].size * 4 + kparams["b2"].size * 4)
    bytes_accessed = (Bp * CONTEXT_SIZE * 4            # indices in
                      + Bp * VOCAB_SIZE * out_bytes    # logits out
                      + weight_bytes)

    out = pl.pallas_call(
        _fused_lm_kernel,
        out_shape=jax.ShapeDtypeStruct((Bp, VOCAB_SIZE), out_dtype),
        grid_spec=pltpu.PrefetchScalarGridSpec(
            num_scalar_prefetch=0,
            grid=grid,
            in_specs=[
                pl.BlockSpec((tile_b, CONTEXT_SIZE), lambda i: (i, 0)),
                # Constant-index weight specs: resident in VMEM across steps.
                pl.BlockSpec((STACKED_K, HIDDEN), lambda i: (0, 0)),
                pl.BlockSpec((1, HIDDEN), lambda i: (0, 0)),
                pl.BlockSpec((HIDDEN, VOCAB_SIZE), lambda i: (0, 0)),
                pl.BlockSpec((1, VOCAB_SIZE), lambda i: (0, 0)),
            ],
            out_specs=pl.BlockSpec((tile_b, VOCAB_SIZE), lambda i: (i, 0)),
        ),
        compiler_params=pltpu.CompilerParams(
            dimension_semantics=("parallel",),
        ),
        cost_estimate=pl.CostEstimate(flops=flops, transcendentals=0,
                                      bytes_accessed=bytes_accessed),
    )(x_idx, kparams["w1eff"], kparams["b1"], kparams["w2"], kparams["b2"])
    return out[:B]


def init_params(key):
    """Deterministic synthetic f32 master parameters matching NeuralLM_1's shapes.

    PyTorch shapes: embedding (V, D); fc1.weight (128, C*D); fc2.weight (V, 128).
    Linear weights are stored transposed as (in, out)."""
    k_emb, k_w1, k_b1, k_w2, k_b2 = jax.random.split(key, 5)
    emb = jax.random.normal(k_emb, (VOCAB_SIZE, EMBEDDING_DIM), jnp.float32) * 0.1
    w1 = jax.random.normal(k_w1, (IN_FEATURES, HIDDEN), jnp.float32) * (1.0 / jnp.sqrt(IN_FEATURES))
    b1 = jax.random.normal(k_b1, (1, HIDDEN), jnp.float32) * 0.01
    w2 = jax.random.normal(k_w2, (HIDDEN, VOCAB_SIZE), jnp.float32) * (1.0 / jnp.sqrt(HIDDEN))
    b2 = jax.random.normal(k_b2, (1, VOCAB_SIZE), jnp.float32) * 0.01
    return {"embedding": emb, "w1": w1, "b1": b1, "w2": w2, "b2": b2}


def reference_forward_f32(x_idx, params):
    """Pure f32 reference (exact module semantics, inference mode)."""
    emb, w1, b1, w2, b2 = (params["embedding"], params["w1"], params["b1"],
                           params["w2"], params["b2"])
    B = x_idx.shape[0]
    x = jnp.take(emb, x_idx.reshape(-1), axis=0).reshape(B, IN_FEATURES)
    h = jnp.maximum(x @ w1 + b1, 0.0)
    return h @ w2 + b2


def reference_forward_matched(x_idx, kparams):
    """Reference matching the kernel's folded bf16-operand / f32-accumulate numerics."""
    w1e = kparams["w1eff"].reshape(CONTEXT_SIZE, VOCAB_SIZE, HIDDEN)  # bf16
    h = jnp.zeros((x_idx.shape[0], HIDDEN), jnp.float32)
    for c in range(CONTEXT_SIZE):
        h = h + jnp.take(w1e[c], x_idx[:, c], axis=0).astype(jnp.float32)
    h = jnp.maximum(h + kparams["b1"], 0.0)
    return jnp.dot(h.astype(jnp.bfloat16), kparams["w2"],
                   preferred_element_type=jnp.float32) + kparams["b2"]


if __name__ == "__main__":
    key = jax.random.PRNGKey(0)
    k_params, k_idx = jax.random.split(key)

    params = init_params(k_params)
    kparams = prepare_kernel_params(params)

    # Main case: B=512 -> auto tile_b=128 -> grid=(4,) (2 steps per v7x core).
    B = 512
    x_idx = jax.random.randint(k_idx, (B, CONTEXT_SIZE), 0, VOCAB_SIZE, dtype=jnp.int32)

    logits = neural_lm_forward(x_idx, kparams)            # bf16 logits (default)
    logits = jax.block_until_ready(logits)
    assert logits.shape == (B, VOCAB_SIZE)
    assert logits.dtype == jnp.bfloat16

    logits_f32 = logits.astype(jnp.float32)
    ref_matched = reference_forward_matched(x_idx, kparams)
    ref_f32 = reference_forward_f32(x_idx, params)
    assert jnp.allclose(logits_f32, ref_matched, atol=1e-2, rtol=1e-2), \
        "mismatch vs folded/bf16-matched reference"
    assert jnp.allclose(logits_f32, ref_f32, atol=5e-2, rtol=5e-2), \
        "mismatch vs f32 reference"

    # Ragged-batch case with f32 output: exercises padding/tile-shrink path and
    # the non-default output dtype.
    B2 = 20
    x_idx2 = jax.random.randint(jax.random.PRNGKey(1), (B2, CONTEXT_SIZE), 0,
                                VOCAB_SIZE, dtype=jnp.int32)
    logits2 = jax.block_until_ready(
        neural_lm_forward(x_idx2, kparams, out_dtype=jnp.float32))
    assert logits2.shape == (B2, VOCAB_SIZE)
    assert logits2.dtype == jnp.float32
    assert jnp.allclose(logits2, reference_forward_matched(x_idx2, kparams),
                        atol=1e-2, rtol=1e-2), "mismatch on padded batch"

    print("KERNEL_OK")
</pallas_src>

<mosaic_0001>
module attributes {stable_mosaic.version = 11 : i64} {
  func.func @_fused_lm_kernel(%arg0: i32, %arg1: memref<128x3xi32, #tpu.memory_space<vmem>>, %arg2: memref<768x128xbf16, #tpu.memory_space<vmem>>, %arg3: memref<1x128xf32, #tpu.memory_space<vmem>>, %arg4: memref<128x256xbf16, #tpu.memory_space<vmem>>, %arg5: memref<1x256xf32, #tpu.memory_space<vmem>>, %arg6: memref<128x256xbf16, #tpu.memory_space<vmem>>) attributes {dimension_semantics = [#tpu.dimension_semantics<parallel>], iteration_bounds = array<i64: 4>, scalar_prefetch = 0 : i64, scratch_operands = 0 : i64, tpu.core_type = #tpu.core_type<tc>, window_params = [{transform_indices = @transform_0, window_bounds = array<i64: 128, 3>}, {pipeline_mode = #tpu.pipeline_mode<synchronous>, transform_indices = @transform_1, window_bounds = array<i64: 768, 128>}, {pipeline_mode = #tpu.pipeline_mode<synchronous>, transform_indices = @transform_2, window_bounds = array<i64: 1, 128>}, {pipeline_mode = #tpu.pipeline_mode<synchronous>, transform_indices = @transform_3, window_bounds = array<i64: 128, 256>}, {pipeline_mode = #tpu.pipeline_mode<synchronous>, transform_indices = @transform_4, window_bounds = array<i64: 1, 256>}, {transform_indices = @transform_5, window_bounds = array<i64: 128, 256>}]} {
    %c0 = arith.constant 0 : index
    %c0_0 = arith.constant 0 : index
    %0 = vector.load %arg1[%c0, %c0_0] : memref<128x3xi32, #tpu.memory_space<vmem>>, vector<128x3xi32>
    %1 = tpu.iota {dimensions = array<i32: 1>} : vector<128x768xi32>
    %2 = vector.extract_strided_slice %0 {offsets = [0, 0], sizes = [128, 1], strides = [1, 1]} : vector<128x3xi32> to vector<128x1xi32>
    %3 = vector.broadcast %2 : vector<128x1xi32> to vector<128x768xi32>
    %4 = arith.cmpi eq, %1, %3 : vector<128x768xi32>
    %5 = vector.extract_strided_slice %0 {offsets = [0, 1], sizes = [128, 1], strides = [1, 1]} : vector<128x3xi32> to vector<128x1xi32>
    %c256_i32 = arith.constant 256 : i32
    %6 = vector.broadcast %c256_i32 : i32 to vector<128x1xi32>
    %7 = arith.addi %5, %6 : vector<128x1xi32>
    %8 = vector.broadcast %7 : vector<128x1xi32> to vector<128x768xi32>
    %9 = arith.cmpi eq, %1, %8 : vector<128x768xi32>
    %10 = arith.ori %4, %9 : vector<128x768xi1>
    %11 = vector.extract_strided_slice %0 {offsets = [0, 2], sizes = [128, 1], strides = [1, 1]} : vector<128x3xi32> to vector<128x1xi32>
    %c512_i32 = arith.constant 512 : i32
    %12 = vector.broadcast %c512_i32 : i32 to vector<128x1xi32>
    %13 = arith.addi %11, %12 : vector<128x1xi32>
    %14 = vector.broadcast %13 : vector<128x1xi32> to vector<128x768xi32>
    %15 = arith.cmpi eq, %1, %14 : vector<128x768xi32>
    %16 = arith.ori %10, %15 : vector<128x768xi1>
    %17 = arith.extui %16 : vector<128x768xi1> to vector<128x768xi32>
    %18 = arith.sitofp %17 : vector<128x768xi32> to vector<128x768xf32>
    %19 = arith.truncf %18 : vector<128x768xf32> to vector<128x768xbf16>
    %c0_1 = arith.constant 0 : index
    %c0_2 = arith.constant 0 : index
    %20 = vector.load %arg2[%c0_1, %c0_2] : memref<768x128xbf16, #tpu.memory_space<vmem>>, vector<768x128xbf16>
    %cst = arith.constant dense<0.000000e+00> : vector<128x128xf32>
    %21 = tpu.matmul %19, %20, %cst {dimension_numbers = #tpu.dot_dimension_numbers<[1], [0], [0], [1], [0, 0, 1, 1], [], []>} : vector<128x768xbf16>, vector<768x128xbf16>, vector<128x128xf32> -> vector<128x128xf32>
    %c0_3 = arith.constant 0 : index
    %c0_4 = arith.constant 0 : index
    %22 = vector.load %arg3[%c0_3, %c0_4] : memref<1x128xf32, #tpu.memory_space<vmem>>, vector<1x128xf32>
    %23 = vector.broadcast %22 : vector<1x128xf32> to vector<128x128xf32>
    %24 = arith.addf %21, %23 : vector<128x128xf32>
    %cst_5 = arith.constant 0.000000e+00 : f32
    %25 = vector.broadcast %cst_5 : f32 to vector<128x128xf32>
    %26 = arith.maximumf %24, %25 : vector<128x128xf32>
    %27 = arith.truncf %26 : vector<128x128xf32> to vector<128x128xbf16>
    %c0_6 = arith.constant 0 : index
    %c0_7 = arith.constant 0 : index
    %28 = vector.load %arg4[%c0_6, %c0_7] : memref<128x256xbf16, #tpu.memory_space<vmem>>, vector<128x256xbf16>
    %cst_8 = arith.constant dense<0.000000e+00> : vector<128x256xf32>
    %29 = tpu.matmul %27, %28, %cst_8 {dimension_numbers = #tpu.dot_dimension_numbers<[1], [0], [0], [1], [0, 0, 1, 1], [], []>} : vector<128x128xbf16>, vector<128x256xbf16>, vector<128x256xf32> -> vector<128x256xf32>
    %c0_9 = arith.constant 0 : index
    %c0_10 = arith.constant 0 : index
    %30 = vector.load %arg5[%c0_9, %c0_10] : memref<1x256xf32, #tpu.memory_space<vmem>>, vector<1x256xf32>
    %31 = vector.broadcast %30 : vector<1x256xf32> to vector<128x256xf32>
    %32 = arith.addf %29, %31 : vector<128x256xf32>
    %33 = arith.truncf %32 : vector<128x256xf32> to vector<128x256xbf16>
    %c0_11 = arith.constant 0 : index
    %c0_12 = arith.constant 0 : index
    %34 = vector.load %arg6[%c0_11, %c0_12] : memref<128x256xbf16, #tpu.memory_space<vmem>>, vector<128x256xbf16>
    tpu.vector_store %arg6[%c0_11, %c0_12], %33 {strides = array<i32>} : memref<128x256xbf16, #tpu.memory_space<vmem>>, vector<128x256xbf16>,
    return
  }
  func.func @transform_0(%arg0: i32) -> (i32, i32) {
    %c0_i32 = arith.constant 0 : i32
    %c0_i32_0 = arith.constant 0 : i32
    return %arg0, %c0_i32 : i32, i32
  }
  func.func @transform_1(%arg0: i32) -> (i32, i32) {
    %c0_i32 = arith.constant 0 : i32
    %c0_i32_0 = arith.constant 0 : i32
    %c0_i32_1 = arith.constant 0 : i32
    return %c0_i32, %c0_i32_0 : i32, i32
  }
  func.func @transform_2(%arg0: i32) -> (i32, i32) {
    %c0_i32 = arith.constant 0 : i32
    %c0_i32_0 = arith.constant 0 : i32
    %c0_i32_1 = arith.constant 0 : i32
    return %c0_i32, %c0_i32_0 : i32, i32
  }
  func.func @transform_3(%arg0: i32) -> (i32, i32) {
    %c0_i32 = arith.constant 0 : i32
    %c0_i32_0 = arith.constant 0 : i32
    %c0_i32_1 = arith.constant 0 : i32
    return %c0_i32, %c0_i32_0 : i32, i32
  }
  func.func @transform_4(%arg0: i32) -> (i32, i32) {
    %c0_i32 = arith.constant 0 : i32
    %c0_i32_0 = arith.constant 0 : i32
    %c0_i32_1 = arith.constant 0 : i32
    return %c0_i32, %c0_i32_0 : i32, i32
  }
  func.func @transform_5(%arg0: i32) -> (i32, i32) {
    %c0_i32 = arith.constant 0 : i32
    %c0_i32_0 = arith.constant 0 : i32
    return %arg0, %c0_i32 : i32, i32
  }
}

</mosaic_0001>

<llo_original>
// kernel: tpu_custom_call.1
$region0: #{tpu_custom_call.1}
  #allocation0 [shape = 'u32[]', space=smem, size = 0x4, offset = 0x4, fixed_abs, tag = 'smem constant byte address 0x4 - core index']
  #allocation1 [shape = 'u32[144,128]{1,0:T(1,128)}', space=vmem, size = 0x12000, scoped, tag = 'internal scratch']
  %s0 = inlined_call_operand.vmem [shape: s32[512,3], index: 0, kind: input, shape index: {}]
  %s1 = inlined_call_operand.vmem [shape: bf16[768,128], index: 1, kind: input, shape index: {}]
  %s2 = inlined_call_operand.vmem [shape: f32[1,128], index: 2, kind: input, shape index: {}]
  %s3 = inlined_call_operand.vmem [shape: bf16[128,256], index: 3, kind: input, shape index: {}]
  %s4 = inlined_call_operand.vmem [shape: f32[1,256], index: 4, kind: input, shape index: {}]
  %s5 = inlined_call_operand.hbm [shape: bf16[512,256], index: 5, kind: output, shape index: {}]
  %s6 = sld [smem:[#allocation0]]
  $region53: #{tpu_custom_call.1} parent=0
    _
  %s8 = ssub.s32 1, %s6
  %s9 = scalar_select 0, %s8, %s6
  $region1: #{tpu_custom_call.1} parent=0
    #allocation2 [shape = 'u8[131072]{0}', space=vmem, size = 0x20000, scoped, tag = 'output window, operand 0']
    #allocation3 [shape = 's32[2]{0}', space=sflag, size = 0x8, scoped, tag = 'scoped memory for tpu_custom_call.1']
    %10 = vsyncpa [#allocation3], 0
    %s11 = scalar_lea.sflag [#allocation3], 1
    %12 = vsyncpa %s11, 0
    loop: start=0, step=1, limit=6
    $region2: #{tpu_custom_call.1} parent=1 // loop_pre_header
      _
    $region3: #{tpu_custom_call.1} parent=1 // loop_header
      %s14 = sphi 0, %s18
      %p15 = scmp.ge.s32.totalorder %s14, 6
      %s24 = sphi 0, %s26
      %s27 = sphi 0, %s24
      %s28 = sphi 0, %s27
      %s44 = sphi 0, %s28
      %s48 = sphi 0, %s48
      %s50 = sphi 0, %s48
      %s51 = sphi 0, %s50
      %s65 = sphi 0, %s51
      %s69 = sphi 0, %s69
      %s71 = sphi 0, %s69
      %s72 = sphi 0, %s71
      %s86 = sphi 0, %s72
      %s90 = sphi 0, %s90
      %s92 = sphi 0, %s90
      %s93 = sphi 0, %s92
      %s107 = sphi 0, %s93
      %s111 = sphi 0, %s111
      %s113 = sphi 0, %s111
      %s114 = sphi 0, %s113
      %s128 = sphi 0, %s114
      %s134 = sphi 0, %s136
      %s137 = sphi 0, %s134
      %s138 = sphi 0, %s137
      %s154 = sphi 0, %s138
    $region4: #{tpu_custom_call.1} parent=1 // loop_header_branch
      %17 = sbr.rel (%p15) target = $region8
    $region5: #{tpu_custom_call.1} parent=1 // loop_body
      %s19 = ssub.s32 %s14, 1
      %s20 = ssub.s32 %s14, 2
      %s21 = sadd.s32 %s14, 1
      %s22 = ssub.s32 %s14, %s21
      %p23 = scmp.eq.s32.totalorder %s22, 0
      %s25 = sadd.s32 %s24, 1
      %s26 = scalar_select %p23, %s24, %s25
      %p29 = pneg %p23
      %p30 = scmp.eq.s32.totalorder %s14, 3
      %p31 = por %p29, %p30
      %p32 = scmp.ne.s32.totalorder %s24, %s27
      %p33 = scmp.eq.s32.totalorder %s14, 0
      %p34 = por %p32, %p33
      %p35 = scmp.ne.s32.totalorder %s24, %s27
      %p36 = scmp.eq.s32.totalorder %s19, 3
      %p37 = por %p35, %p36
      %p38 = scmp.ne.s32.totalorder %s27, %s28
      %p39 = scmp.eq.s32.totalorder %s19, 0
      %p40 = por %p38, %p39
      %p41 = scmp.ne.s32.totalorder %s27, %s28
      %p42 = scmp.eq.s32.totalorder %s20, 3
      %p43 = por %p41, %p42
      %p45 = scmp.ne.s32.totalorder %s28, %s44
      %p46 = scmp.eq.s32.totalorder %s20, 0
      %p47 = por %p45, %p46
      %s49 = sadd.s32 %s48, 1
      %p52 = scmp.eq.s32.totalorder %s14, 3
      %p53 = scmp.ne.s32.totalorder %s48, %s50
      %p54 = scmp.eq.s32.totalorder %s14, 0
      %p55 = por %p53, %p54
      %p56 = scmp.ne.s32.totalorder %s48, %s50
      %p57 = scmp.eq.s32.totalorder %s19, 3
      %p58 = por %p56, %p57
      %p59 = scmp.ne.s32.totalorder %s50, %s51
      %p60 = scmp.eq.s32.totalorder %s19, 0
      %p61 = por %p59, %p60
      %p62 = scmp.ne.s32.totalorder %s50, %s51
      %p63 = scmp.eq.s32.totalorder %s20, 3
      %p64 = por %p62, %p63
      %p66 = scmp.ne.s32.totalorder %s51, %s65
      %p67 = scmp.eq.s32.totalorder %s20, 0
      %p68 = por %p66, %p67
      %s70 = sadd.s32 %s69, 1
      %p73 = scmp.eq.s32.totalorder %s14, 3
      %p74 = scmp.ne.s32.totalorder %s69, %s71
      %p75 = scmp.eq.s32.totalorder %s14, 0
      %p76 = por %p74, %p75
      %p77 = scmp.ne.s32.totalorder %s69, %s71
      %p78 = scmp.eq.s32.totalorder %s19, 3
      %p79 = por %p77, %p78
      %p80 = scmp.ne.s32.totalorder %s71, %s72
      %p81 = scmp.eq.s32.totalorder %s19, 0
      %p82 = por %p80, %p81
      %p83 = scmp.ne.s32.totalorder %s71, %s72
      %p84 = scmp.eq.s32.totalorder %s20, 3
      %p85 = por %p83, %p84
      %p87 = scmp.ne.s32.totalorder %s72, %s86
      %p88 = scmp.eq.s32.totalorder %s20, 0
      %p89 = por %p87, %p88
      %s91 = sadd.s32 %s90, 1
      %p94 = scmp.eq.s32.totalorder %s14, 3
      %p95 = scmp.ne.s32.totalorder %s90, %s92
      %p96 = scmp.eq.s32.totalorder %s14, 0
      %p97 = por %p95, %p96
      %p98 = scmp.ne.s32.totalorder %s90, %s92
      %p99 = scmp.eq.s32.totalorder %s19, 3
      %p100 = por %p98, %p99
      %p101 = scmp.ne.s32.totalorder %s92, %s93
      %p102 = scmp.eq.s32.totalorder %s19, 0
      %p103 = por %p101, %p102
      %p104 = scmp.ne.s32.totalorder %s92, %s93
      %p105 = scmp.eq.s32.totalorder %s20, 3
      %p106 = por %p104, %p105
      %p108 = scmp.ne.s32.totalorder %s93, %s107
      %p109 = scmp.eq.s32.totalorder %s20, 0
      %p110 = por %p108, %p109
      %s112 = sadd.s32 %s111, 1
      %p115 = scmp.eq.s32.totalorder %s14, 3
      %p116 = scmp.ne.s32.totalorder %s111, %s113
      %p117 = scmp.eq.s32.totalorder %s14, 0
      %p118 = por %p116, %p117
      %p119 = scmp.ne.s32.totalorder %s111, %s113
      %p120 = scmp.eq.s32.totalorder %s19, 3
      %p121 = por %p119, %p120
      %p122 = scmp.ne.s32.totalorder %s113, %s114
      %p123 = scmp.eq.s32.totalorder %s19, 0
      %p124 = por %p122, %p123
      %p125 = scmp.ne.s32.totalorder %s113, %s114
      %p126 = scmp.eq.s32.totalorder %s20, 3
      %p127 = por %p125, %p126
      %p129 = scmp.ne.s32.totalorder %s114, %s128
      %p130 = scmp.eq.s32.totalorder %s20, 0
      %p131 = por %p129, %p130
      %s132 = ssub.s32 %s14, %s21
      %p133 = scmp.eq.s32.totalorder %s132, 0
      %s135 = sadd.s32 %s134, 1
      %s136 = scalar_select %p133, %s134, %s135
      %p139 = pneg %p133
      %p140 = scmp.eq.s32.totalorder %s14, 3
      %p141 = por %p139, %p140
      %p142 = scmp.ne.s32.totalorder %s134, %s137
      %p143 = scmp.eq.s32.totalorder %s14, 0
      %p144 = por %p142, %p143
      %p145 = scmp.ne.s32.totalorder %s134, %s137
      %p146 = scmp.eq.s32.totalorder %s19, 3
      %p147 = por %p145, %p146
      %p148 = scmp.ne.s32.totalorder %s137, %s138
      %p149 = scmp.eq.s32.totalorder %s19, 0
      %p150 = por %p148, %p149
      %p151 = scmp.ne.s32.totalorder %s137, %s138
      %p152 = scmp.eq.s32.totalorder %s20, 3
      %p153 = por %p151, %p152
      %p155 = scmp.ne.s32.totalorder %s138, %s154
      %p156 = scmp.eq.s32.totalorder %s20, 0
      %p157 = por %p155, %p156
      %p158 = scmp.le.s32.totalorder 1, %s14
      %p159 = scmp.lt.s32.totalorder %s14, 5
      %p160 = pnand %p158, %p159
      %p161 = pneg %p160
      // Predicated region
      $region9: #{tpu_custom_call.1} parent=5 // pred_check
        _
      $region10: #{tpu_custom_call.1} parent=5 // pred_check_branch
        %163 = sbr.rel (%p160) target = $region12
      $region11: #{tpu_custom_call.1} parent=5 // pred_region
        %s164 = ssub.s32 %s14, 1
        // Predicated region
        $region13: #{tpu_custom_call.1} parent=11 // pred_check
          %p165 = pneg %p61
        $region14: #{tpu_custom_call.1} parent=11 // pred_check_branch
          %167 = sbr.rel (%p165) target = $region16
        $region15: #{tpu_custom_call.1} parent=11 // pred_region
          _
        $region16: #{tpu_custom_call.1} parent=11 // pred_fallthru
          _
        // Predicated region
        $region17: #{tpu_custom_call.1} parent=11 // pred_check
          %p168 = pneg %p82
        $region18: #{tpu_custom_call.1} parent=11 // pred_check_branch
          %170 = sbr.rel (%p168) target = $region20
        $region19: #{tpu_custom_call.1} parent=11 // pred_region
          _
        $region20: #{tpu_custom_call.1} parent=11 // pred_fallthru
          _
        // Predicated region
        $region21: #{tpu_custom_call.1} parent=11 // pred_check
          %p171 = pneg %p103
        $region22: #{tpu_custom_call.1} parent=11 // pred_check_branch
          %173 = sbr.rel (%p171) target = $region24
        $region23: #{tpu_custom_call.1} parent=11 // pred_region
          _
        $region24: #{tpu_custom_call.1} parent=11 // pred_fallthru
          _
        // Predicated region
        $region25: #{tpu_custom_call.1} parent=11 // pred_check
          %p174 = pneg %p124
        $region26: #{tpu_custom_call.1} parent=11 // pred_check_branch
          %176 = sbr.rel (%p174) target = $region28
        $region27: #{tpu_custom_call.1} parent=11 // pred_region
          _
        $region28: #{tpu_custom_call.1} parent=11 // pred_fallthru
          _
      $region12: #{tpu_custom_call.1} parent=5 // pred_fallthru
        _
      %p177 = scmp.lt.s32.totalorder %s14, 4
      // Predicated region
      $region29: #{tpu_custom_call.1} parent=5 // pred_check
        %p178 = pneg %p177
      $region30: #{tpu_custom_call.1} parent=5 // pred_check_branch
        %180 = sbr.rel (%p178) target = $region32
      $region31: #{tpu_custom_call.1} parent=5 // pred_region
        // Predicated region
        $region33: #{tpu_custom_call.1} parent=31 // pred_check
          %p181 = pneg %p34
        $region34: #{tpu_custom_call.1} parent=31 // pred_check_branch
          %183 = sbr.rel (%p181) target = $region36
        $region35: #{tpu_custom_call.1} parent=31 // pred_region
          %s184 = smul.u32 16, %s14
          %p185 = scmp.lt.s32.totalorder %s184, 63
          %s186 = scalar_select %p185, %s184, 63
          %s187 = smul.addr %s186, 8
          %s188 = scalar_lea.vmem %s0, %s187
          %s189 = smul.u32 16, %s14
        $region36: #{tpu_custom_call.1} parent=31 // pred_fallthru
          _
      $region32: #{tpu_custom_call.1} parent=5 // pred_fallthru
        _
      %p190 = scmp.le.s32.totalorder 1, %s14
      %p191 = scmp.lt.s32.totalorder %s14, 5
      %p192 = pnand %p190, %p191
      %p193 = pneg %p192
      // Predicated region
      $region37: #{tpu_custom_call.1} parent=5 // pred_check
        _
      $region38: #{tpu_custom_call.1} parent=5 // pred_check_branch
        %195 = sbr.rel (%p192) target = $region40
      $region39: #{tpu_custom_call.1} parent=5 // pred_region
        %s196 = ssub.s32 %s14, 1
        %s197 = smul.u32 16, %s19
        %p198 = scmp.lt.s32.totalorder %s197, 63
        %s199 = scalar_select %p198, %s197, 63
        %s200 = smul.addr %s199, 8
        %s201 = scalar_lea.vmem %s0, %s200
        %p202 = pneg %p40
        %p203 = pneg %p37
        %p204 = pneg %p61
        %p205 = pneg %p58
        %p206 = pneg %p82
        %p207 = pneg %p79
        %p208 = pneg %p103
        %p209 = pneg %p100
        %p210 = pneg %p124
        %p211 = pneg %p121
        %p212 = pneg %p150
        %p213 = pneg %p147
        %s214 = sand.u32 %s137, 1
        %s215 = scalar_lea.sflag [#allocation3], %s214
        %s216 = sand.u32 %s137, 1
        %s217 = smul.addr %s216, 128
        %s218 = scalar_lea.vmem [#allocation2], %s217
        %s219 = smul.u32 16, %s19
        %p220 = scmp.lt.s32.totalorder %s219, 63
        %s221 = scalar_select %p220, %s219, 63
        %s222 = smul.addr %s221, 8
        %s223 = scalar_lea.vmem %s0, %s222
        %s224 = smul.u32 16, %s19
        %s225 = smul.u32 16, %s19
        %v227 = vld [vmem:[%s223] sm:$0xff]
        %v228 = vld [vmem:[%s223 + $0x8] sm:$0xff]
        %v229 = vld [vmem:[%s223 + $0x10] sm:$0xff]
        %v230 = vld [vmem:[%s223 + $0x18] sm:$0xff]
        %v231 = vld [vmem:[%s223 + $0x20] sm:$0xff]
        %v232 = vld [vmem:[%s223 + $0x28] sm:$0xff]
        %v233 = vld [vmem:[%s223 + $0x30] sm:$0xff]
        %v234 = vld [vmem:[%s223 + $0x38] sm:$0xff]
        %v235 = vld [vmem:[%s223 + $0x40] sm:$0xff]
        %v236 = vld [vmem:[%s223 + $0x48] sm:$0xff]
        %v237 = vld [vmem:[%s223 + $0x50] sm:$0xff]
        %v238 = vld [vmem:[%s223 + $0x58] sm:$0xff]
        %v239 = vld [vmem:[%s223 + $0x60] sm:$0xff]
        %v240 = vld [vmem:[%s223 + $0x68] sm:$0xff]
        %v241 = vld [vmem:[%s223 + $0x70] sm:$0xff]
        %v242 = vld [vmem:[%s223 + $0x78] sm:$0xff]
        %v243 = vlaneseq
        %v244 = vand.u32 %v243, 127
        %v245 = vadd.s32 %v244, 128
        %v246 = vadd.s32 %v244, 256
        %v247 = vadd.s32 %v244, 384
        %v248 = vadd.s32 %v244, 512
        %v249 = vadd.s32 %v244, 640
        %250 = vset.pattern.permute.xlu0 0
        %251 = vperm.xlu0 %250, %v227
        %v252 = vpop.permute.xlu0 %251
        %253 = vset.pattern.permute.xlu0 0
        %254 = vperm.xlu0 %253, %v228
        %v255 = vpop.permute.xlu0 %254
        %256 = vset.pattern.permute.xlu0 0
        %257 = vperm.xlu0 %256, %v229
        %v258 = vpop.permute.xlu0 %257
        %259 = vset.pattern.permute.xlu0 0
        %260 = vperm.xlu0 %259, %v230
        %v261 = vpop.permute.xlu0 %260
        %262 = vset.pattern.permute.xlu0 0
        %263 = vperm.xlu0 %262, %v231
        %v264 = vpop.permute.xlu0 %263
        %265 = vset.pattern.permute.xlu0 0
        %266 = vperm.xlu0 %265, %v232
        %v267 = vpop.permute.xlu0 %266
        %268 = vset.pattern.permute.xlu0 0
        %269 = vperm.xlu0 %268, %v233
        %v270 = vpop.permute.xlu0 %269
        %271 = vset.pattern.permute.xlu0 0
        %272 = vperm.xlu0 %271, %v234
        %v273 = vpop.permute.xlu0 %272
        %274 = vset.pattern.permute.xlu0 0
        %275 = vperm.xlu0 %274, %v235
        %v276 = vpop.permute.xlu0 %275
        %277 = vset.pattern.permute.xlu0 0
        %278 = vperm.xlu0 %277, %v236
        %v279 = vpop.permute.xlu0 %278
        %280 = vset.pattern.permute.xlu0 0
        %281 = vperm.xlu0 %280, %v237
        %v282 = vpop.permute.xlu0 %281
        %283 = vset.pattern.permute.xlu0 0
        %284 = vperm.xlu0 %283, %v238
        %v285 = vpop.permute.xlu0 %284
        %286 = vset.pattern.permute.xlu0 0
        %287 = vperm.xlu0 %286, %v239
        %v288 = vpop.permute.xlu0 %287
        %289 = vset.pattern.permute.xlu0 0
        %290 = vperm.xlu0 %289, %v240
        %v291 = vpop.permute.xlu0 %290
        %292 = vset.pattern.permute.xlu0 0
        %293 = vperm.xlu0 %292, %v241
        %v294 = vpop.permute.xlu0 %293
        %295 = vset.pattern.permute.xlu0 0
        %296 = vperm.xlu0 %295, %v242
        %v297 = vpop.permute.xlu0 %296
        %vm298 = vcmp.eq.s32.totalorder %v244, %v252
        %vm299 = vcmp.eq.s32.totalorder %v245, %v252
        %vm300 = vcmp.eq.s32.totalorder %v246, %v252
        %vm301 = vcmp.eq.s32.totalorder %v247, %v252
        %vm302 = vcmp.eq.s32.totalorder %v248, %v252
        %vm303 = vcmp.eq.s32.totalorder %v249, %v252
        %vm304 = vcmp.eq.s32.totalorder %v244, %v255
        %vm305 = vcmp.eq.s32.totalorder %v245, %v255
        %vm306 = vcmp.eq.s32.totalorder %v246, %v255
        %vm307 = vcmp.eq.s32.totalorder %v247, %v255
        %vm308 = vcmp.eq.s32.totalorder %v248, %v255
        %vm309 = vcmp.eq.s32.totalorder %v249, %v255
        %vm310 = vcmp.eq.s32.totalorder %v244, %v258
        %vm311 = vcmp.eq.s32.totalorder %v245, %v258
        %vm312 = vcmp.eq.s32.totalorder %v246, %v258
        %vm313 = vcmp.eq.s32.totalorder %v247, %v258
        %vm314 = vcmp.eq.s32.totalorder %v248, %v258
        %vm315 = vcmp.eq.s32.totalorder %v249, %v258
        %vm316 = vcmp.eq.s32.totalorder %v244, %v261
        %vm317 = vcmp.eq.s32.totalorder %v245, %v261
        %vm318 = vcmp.eq.s32.totalorder %v246, %v261
        %vm319 = vcmp.eq.s32.totalorder %v247, %v261
        %vm320 = vcmp.eq.s32.totalorder %v248, %v261
        %vm321 = vcmp.eq.s32.totalorder %v249, %v261
        %vm322 = vcmp.eq.s32.totalorder %v244, %v264
        %vm323 = vcmp.eq.s32.totalorder %v245, %v264
        %vm324 = vcmp.eq.s32.totalorder %v246, %v264
        %vm325 = vcmp.eq.s32.totalorder %v247, %v264
        %vm326 = vcmp.eq.s32.totalorder %v248, %v264
        %vm327 = vcmp.eq.s32.totalorder %v249, %v264
        %vm328 = vcmp.eq.s32.totalorder %v244, %v267
        %vm329 = vcmp.eq.s32.totalorder %v245, %v267
        %vm330 = vcmp.eq.s32.totalorder %v246, %v267
        %vm331 = vcmp.eq.s32.totalorder %v247, %v267
        %vm332 = vcmp.eq.s32.totalorder %v248, %v267
        %vm333 = vcmp.eq.s32.totalorder %v249, %v267
        %vm334 = vcmp.eq.s32.totalorder %v244, %v270
        %vm335 = vcmp.eq.s32.totalorder %v245, %v270
        %vm336 = vcmp.eq.s32.totalorder %v246, %v270
        %vm337 = vcmp.eq.s32.totalorder %v247, %v270
        %vm338 = vcmp.eq.s32.totalorder %v248, %v270
        %vm339 = vcmp.eq.s32.totalorder %v249, %v270
        %vm340 = vcmp.eq.s32.totalorder %v244, %v273
        %vm341 = vcmp.eq.s32.totalorder %v245, %v273
        %vm342 = vcmp.eq.s32.totalorder %v246, %v273
        %vm343 = vcmp.eq.s32.totalorder %v247, %v273
        %vm344 = vcmp.eq.s32.totalorder %v248, %v273
        %vm345 = vcmp.eq.s32.totalorder %v249, %v273
        %vm346 = vcmp.eq.s32.totalorder %v244, %v276
        %vm347 = vcmp.eq.s32.totalorder %v245, %v276
        %vm348 = vcmp.eq.s32.totalorder %v246, %v276
        %vm349 = vcmp.eq.s32.totalorder %v247, %v276
        %vm350 = vcmp.eq.s32.totalorder %v248, %v276
        %vm351 = vcmp.eq.s32.totalorder %v249, %v276
        %vm352 = vcmp.eq.s32.totalorder %v244, %v279
        %vm353 = vcmp.eq.s32.totalorder %v245, %v279
        %vm354 = vcmp.eq.s32.totalorder %v246, %v279
        %vm355 = vcmp.eq.s32.totalorder %v247, %v279
        %vm356 = vcmp.eq.s32.totalorder %v248, %v279
        %vm357 = vcmp.eq.s32.totalorder %v249, %v279
        %vm358 = vcmp.eq.s32.totalorder %v244, %v282
        %vm359 = vcmp.eq.s32.totalorder %v245, %v282
        %vm360 = vcmp.eq.s32.totalorder %v246, %v282
        %vm361 = vcmp.eq.s32.totalorder %v247, %v282
        %vm362 = vcmp.eq.s32.totalorder %v248, %v282
        %vm363 = vcmp.eq.s32.totalorder %v249, %v282
        %vm364 = vcmp.eq.s32.totalorder %v244, %v285
        %vm365 = vcmp.eq.s32.totalorder %v245, %v285
        %vm366 = vcmp.eq.s32.totalorder %v246, %v285
        %vm367 = vcmp.eq.s32.totalorder %v247, %v285
        %vm368 = vcmp.eq.s32.totalorder %v248, %v285
        %vm369 = vcmp.eq.s32.totalorder %v249, %v285
        %vm370 = vcmp.eq.s32.totalorder %v244, %v288
        %vm371 = vcmp.eq.s32.totalorder %v245, %v288
        %vm372 = vcmp.eq.s32.totalorder %v246, %v288
        %vm373 = vcmp.eq.s32.totalorder %v247, %v288
        %vm374 = vcmp.eq.s32.totalorder %v248, %v288
        %vm375 = vcmp.eq.s32.totalorder %v249, %v288
        %vm376 = vcmp.eq.s32.totalorder %v244, %v291
        %vm377 = vcmp.eq.s32.totalorder %v245, %v291
        %vm378 = vcmp.eq.s32.totalorder %v246, %v291
        %vm379 = vcmp.eq.s32.totalorder %v247, %v291
        %vm380 = vcmp.eq.s32.totalorder %v248, %v291
        %vm381 = vcmp.eq.s32.totalorder %v249, %v291
        %vm382 = vcmp.eq.s32.totalorder %v244, %v294
        %vm383 = vcmp.eq.s32.totalorder %v245, %v294
        %vm384 = vcmp.eq.s32.totalorder %v246, %v294
        %vm385 = vcmp.eq.s32.totalorder %v247, %v294
        %vm386 = vcmp.eq.s32.totalorder %v248, %v294
        %vm387 = vcmp.eq.s32.totalorder %v249, %v294
        %vm388 = vcmp.eq.s32.totalorder %v244, %v297
        %vm389 = vcmp.eq.s32.totalorder %v245, %v297
        %vm390 = vcmp.eq.s32.totalorder %v246, %v297
        %vm391 = vcmp.eq.s32.totalorder %v247, %v297
        %vm392 = vcmp.eq.s32.totalorder %v248, %v297
        %vm393 = vcmp.eq.s32.totalorder %v249, %v297
        %v394 = vadd.s32 %v227, 256
        %v395 = vadd.s32 %v228, 256
        %v396 = vadd.s32 %v229, 256
        %v397 = vadd.s32 %v230, 256
        %v398 = vadd.s32 %v231, 256
        %v399 = vadd.s32 %v232, 256
        %v400 = vadd.s32 %v233, 256
        %v401 = vadd.s32 %v234, 256
        %v402 = vadd.s32 %v235, 256
        %v403 = vadd.s32 %v236, 256
        %v404 = vadd.s32 %v237, 256
        %v405 = vadd.s32 %v238, 256
        %v406 = vadd.s32 %v239, 256
        %v407 = vadd.s32 %v240, 256
        %v408 = vadd.s32 %v241, 256
        %v409 = vadd.s32 %v242, 256
        %410 = vset.pattern.permute.xlu0 1
        %411 = vperm.xlu0 %410, %v394
        %v412 = vpop.permute.xlu0 %411
        %413 = vset.pattern.permute.xlu0 1
        %414 = vperm.xlu0 %413, %v395
        %v415 = vpop.permute.xlu0 %414
        %416 = vset.pattern.permute.xlu0 1
        %417 = vperm.xlu0 %416, %v396
        %v418 = vpop.permute.xlu0 %417
        %419 = vset.pattern.permute.xlu0 1
        %420 = vperm.xlu0 %419, %v397
        %v421 = vpop.permute.xlu0 %420
        %422 = vset.pattern.permute.xlu0 1
        %423 = vperm.xlu0 %422, %v398
        %v424 = vpop.permute.xlu0 %423
        %425 = vset.pattern.permute.xlu0 1
        %426 = vperm.xlu0 %425, %v399
        %v427 = vpop.permute.xlu0 %426
        %428 = vset.pattern.permute.xlu0 1
        %429 = vperm.xlu0 %428, %v400
        %v430 = vpop.permute.xlu0 %429
        %431 = vset.pattern.permute.xlu0 1
        %432 = vperm.xlu0 %431, %v401
        %v433 = vpop.permute.xlu0 %432
        %434 = vset.pattern.permute.xlu0 1
        %435 = vperm.xlu0 %434, %v402
        %v436 = vpop.permute.xlu0 %435
        %437 = vset.pattern.permute.xlu0 1
        %438 = vperm.xlu0 %437, %v403
        %v439 = vpop.permute.xlu0 %438
        %440 = vset.pattern.permute.xlu0 1
        %441 = vperm.xlu0 %440, %v404
        %v442 = vpop.permute.xlu0 %441
        %443 = vset.pattern.permute.xlu0 1
        %444 = vperm.xlu0 %443, %v405
        %v445 = vpop.permute.xlu0 %444
        %446 = vset.pattern.permute.xlu0 1
        %447 = vperm.xlu0 %446, %v406
        %v448 = vpop.permute.xlu0 %447
        %449 = vset.pattern.permute.xlu0 1
        %450 = vperm.xlu0 %449, %v407
        %v451 = vpop.permute.xlu0 %450
        %452 = vset.pattern.permute.xlu0 1
        %453 = vperm.xlu0 %452, %v408
        %v454 = vpop.permute.xlu0 %453
        %455 = vset.pattern.permute.xlu0 1
        %456 = vperm.xlu0 %455, %v409
        %v457 = vpop.permute.xlu0 %456
        %vm458 = vcmp.eq.s32.totalorder %v244, %v412
        %vm459 = vcmp.eq.s32.totalorder %v245, %v412
        %vm460 = vcmp.eq.s32.totalorder %v246, %v412
        %vm461 = vcmp.eq.s32.totalorder %v247, %v412
        %vm462 = vcmp.eq.s32.totalorder %v248, %v412
        %vm463 = vcmp.eq.s32.totalorder %v249, %v412
        %vm464 = vcmp.eq.s32.totalorder %v244, %v415
        %vm465 = vcmp.eq.s32.totalorder %v245, %v415
        %vm466 = vcmp.eq.s32.totalorder %v246, %v415
        %vm467 = vcmp.eq.s32.totalorder %v247, %v415
        %vm468 = vcmp.eq.s32.totalorder %v248, %v415
        %vm469 = vcmp.eq.s32.totalorder %v249, %v415
        %vm470 = vcmp.eq.s32.totalorder %v244, %v418
        %vm471 = vcmp.eq.s32.totalorder %v245, %v418
        %vm472 = vcmp.eq.s32.totalorder %v246, %v418
        %vm473 = vcmp.eq.s32.totalorder %v247, %v418
        %vm474 = vcmp.eq.s32.totalorder %v248, %v418
        %vm475 = vcmp.eq.s32.totalorder %v249, %v418
        %vm476 = vcmp.eq.s32.totalorder %v244, %v421
        %vm477 = vcmp.eq.s32.totalorder %v245, %v421
        %vm478 = vcmp.eq.s32.totalorder %v246, %v421
        %vm479 = vcmp.eq.s32.totalorder %v247, %v421
        %vm480 = vcmp.eq.s32.totalorder %v248, %v421
        %vm481 = vcmp.eq.s32.totalorder %v249, %v421
        %vm482 = vcmp.eq.s32.totalorder %v244, %v424
        %vm483 = vcmp.eq.s32.totalorder %v245, %v424
        %vm484 = vcmp.eq.s32.totalorder %v246, %v424
        %vm485 = vcmp.eq.s32.totalorder %v247, %v424
        %vm486 = vcmp.eq.s32.totalorder %v248, %v424
        %vm487 = vcmp.eq.s32.totalorder %v249, %v424
        %vm488 = vcmp.eq.s32.totalorder %v244, %v427
        %vm489 = vcmp.eq.s32.totalorder %v245, %v427
        %vm490 = vcmp.eq.s32.totalorder %v246, %v427
        %vm491 = vcmp.eq.s32.totalorder %v247, %v427
        %vm492 = vcmp.eq.s32.totalorder %v248, %v427
        %vm493 = vcmp.eq.s32.totalorder %v249, %v427
        %vm494 = vcmp.eq.s32.totalorder %v244, %v430
        %vm495 = vcmp.eq.s32.totalorder %v245, %v430
        %vm496 = vcmp.eq.s32.totalorder %v246, %v430
        %vm497 = vcmp.eq.s32.totalorder %v247, %v430
        %vm498 = vcmp.eq.s32.totalorder %v248, %v430
        %vm499 = vcmp.eq.s32.totalorder %v249, %v430
        %vm500 = vcmp.eq.s32.totalorder %v244, %v433
        %vm501 = vcmp.eq.s32.totalorder %v245, %v433
        %vm502 = vcmp.eq.s32.totalorder %v246, %v433
        %vm503 = vcmp.eq.s32.totalorder %v247, %v433
        %vm504 = vcmp.eq.s32.totalorder %v248, %v433
        %vm505 = vcmp.eq.s32.totalorder %v249, %v433
        %vm506 = vcmp.eq.s32.totalorder %v244, %v436
        %vm507 = vcmp.eq.s32.totalorder %v245, %v436
        %vm508 = vcmp.eq.s32.totalorder %v246, %v436
        %vm509 = vcmp.eq.s32.totalorder %v247, %v436
        %vm510 = vcmp.eq.s32.totalorder %v248, %v436
        %vm511 = vcmp.eq.s32.totalorder %v249, %v436
        %vm512 = vcmp.eq.s32.totalorder %v244, %v439
        %vm513 = vcmp.eq.s32.totalorder %v245, %v439
        %vm514 = vcmp.eq.s32.totalorder %v246, %v439
        %vm515 = vcmp.eq.s32.totalorder %v247, %v439
        %vm516 = vcmp.eq.s32.totalorder %v248, %v439
        %vm517 = vcmp.eq.s32.totalorder %v249, %v439
        %vm518 = vcmp.eq.s32.totalorder %v244, %v442
        %vm519 = vcmp.eq.s32.totalorder %v245, %v442
        %vm520 = vcmp.eq.s32.totalorder %v246, %v442
        %vm521 = vcmp.eq.s32.totalorder %v247, %v442
        %vm522 = vcmp.eq.s32.totalorder %v248, %v442
        %vm523 = vcmp.eq.s32.totalorder %v249, %v442
        %vm524 = vcmp.eq.s32.totalorder %v244, %v445
        %vm525 = vcmp.eq.s32.totalorder %v245, %v445
        %vm526 = vcmp.eq.s32.totalorder %v246, %v445
        %vm527 = vcmp.eq.s32.totalorder %v247, %v445
        %vm528 = vcmp.eq.s32.totalorder %v248, %v445
        %vm529 = vcmp.eq.s32.totalorder %v249, %v445
        %vm530 = vcmp.eq.s32.totalorder %v244, %v448
        %vm531 = vcmp.eq.s32.totalorder %v245, %v448
        %vm532 = vcmp.eq.s32.totalorder %v246, %v448
        %vm533 = vcmp.eq.s32.totalorder %v247, %v448
        %vm534 = vcmp.eq.s32.totalorder %v248, %v448
        %vm535 = vcmp.eq.s32.totalorder %v249, %v448
        %vm536 = vcmp.eq.s32.totalorder %v244, %v451
        %vm537 = vcmp.eq.s32.totalorder %v245, %v451
        %vm538 = vcmp.eq.s32.totalorder %v246, %v451
        %vm539 = vcmp.eq.s32.totalorder %v247, %v451
        %vm540 = vcmp.eq.s32.totalorder %v248, %v451
        %vm541 = vcmp.eq.s32.totalorder %v249, %v451
        %vm542 = vcmp.eq.s32.totalorder %v244, %v454
        %vm543 = vcmp.eq.s32.totalorder %v245, %v454
        %vm544 = vcmp.eq.s32.totalorder %v246, %v454
        %vm545 = vcmp.eq.s32.totalorder %v247, %v454
        %vm546 = vcmp.eq.s32.totalorder %v248, %v454
        %vm547 = vcmp.eq.s32.totalorder %v249, %v454
        %vm548 = vcmp.eq.s32.totalorder %v244, %v457
        %vm549 = vcmp.eq.s32.totalorder %v245, %v457
        %vm550 = vcmp.eq.s32.totalorder %v246, %v457
        %vm551 = vcmp.eq.s32.totalorder %v247, %v457
        %vm552 = vcmp.eq.s32.totalorder %v248, %v457
        %vm553 = vcmp.eq.s32.totalorder %v249, %v457
        %vm554 = vmor %vm298, %vm458
        %vm555 = vmor %vm299, %vm459
        %vm556 = vmor %vm300, %vm460
        %vm557 = vmor %vm301, %vm461
        %vm558 = vmor %vm302, %vm462
        %vm559 = vmor %vm303, %vm463
        %vm560 = vmor %vm304, %vm464
        %vm561 = vmor %vm305, %vm465
        %vm562 = vmor %vm306, %vm466
        %vm563 = vmor %vm307, %vm467
        %vm564 = vmor %vm308, %vm468
        %vm565 = vmor %vm309, %vm469
        %vm566 = vmor %vm310, %vm470
        %vm567 = vmor %vm311, %vm471
        %vm568 = vmor %vm312, %vm472
        %vm569 = vmor %vm313, %vm473
        %vm570 = vmor %vm314, %vm474
        %vm571 = vmor %vm315, %vm475
        %vm572 = vmor %vm316, %vm476
        %vm573 = vmor %vm317, %vm477
        %vm574 = vmor %vm318, %vm478
        %vm575 = vmor %vm319, %vm479
        %vm576 = vmor %vm320, %vm480
        %vm577 = vmor %vm321, %vm481
        %vm578 = vmor %vm322, %vm482
        %vm579 = vmor %vm323, %vm483
        %vm580 = vmor %vm324, %vm484
        %vm581 = vmor %vm325, %vm485
        %vm582 = vmor %vm326, %vm486
        %vm583 = vmor %vm327, %vm487
        %vm584 = vmor %vm328, %vm488
        %vm585 = vmor %vm329, %vm489
        %vm586 = vmor %vm330, %vm490
        %vm587 = vmor %vm331, %vm491
        %vm588 = vmor %vm332, %vm492
        %vm589 = vmor %vm333, %vm493
        %vm590 = vmor %vm334, %vm494
        %vm591 = vmor %vm335, %vm495
        %vm592 = vmor %vm336, %vm496
        %vm593 = vmor %vm337, %vm497
        %vm594 = vmor %vm338, %vm498
        %vm595 = vmor %vm339, %vm499
        %vm596 = vmor %vm340, %vm500
        %vm597 = vmor %vm341, %vm501
        %vm598 = vmor %vm342, %vm502
        %vm599 = vmor %vm343, %vm503
        %vm600 = vmor %vm344, %vm504
        %vm601 = vmor %vm345, %vm505
        %vm602 = vmor %vm346, %vm506
        %vm603 = vmor %vm347, %vm507
        %vm604 = vmor %vm348, %vm508
        %vm605 = vmor %vm349, %vm509
        %vm606 = vmor %vm350, %vm510
        %vm607 = vmor %vm351, %vm511
        %vm608 = vmor %vm352, %vm512
        %vm609 = vmor %vm353, %vm513
        %vm610 = vmor %vm354, %vm514
        %vm611 = vmor %vm355, %vm515
        %vm612 = vmor %vm356, %vm516
        %vm613 = vmor %vm357, %vm517
        %vm614 = vmor %vm358, %vm518
        %vm615 = vmor %vm359, %vm519
        %vm616 = vmor %vm360, %vm520
        %vm617 = vmor %vm361, %vm521
        %vm618 = vmor %vm362, %vm522
        %vm619 = vmor %vm363, %vm523
        %vm620 = vmor %vm364, %vm524
        %vm621 = vmor %vm365, %vm525
        %vm622 = vmor %vm366, %vm526
        %vm623 = vmor %vm367, %vm527
        %vm624 = vmor %vm368, %vm528
        %vm625 = vmor %vm369, %vm529
        %vm626 = vmor %vm370, %vm530
        %vm627 = vmor %vm371, %vm531
        %vm628 = vmor %vm372, %vm532
        %vm629 = vmor %vm373, %vm533
        %vm630 = vmor %vm374, %vm534
        %vm631 = vmor %vm375, %vm535
        %vm632 = vmor %vm376, %vm536
        %vm633 = vmor %vm377, %vm537
        %vm634 = vmor %vm378, %vm538
        %vm635 = vmor %vm379, %vm539
        %vm636 = vmor %vm380, %vm540
        %vm637 = vmor %vm381, %vm541
        %vm638 = vmor %vm382, %vm542
        %vm639 = vmor %vm383, %vm543
        %vm640 = vmor %vm384, %vm544
        %vm641 = vmor %vm385, %vm545
        %vm642 = vmor %vm386, %vm546
        %vm643 = vmor %vm387, %vm547
        %vm644 = vmor %vm388, %vm548
        %vm645 = vmor %vm389, %vm549
        %vm646 = vmor %vm390, %vm550
        %vm647 = vmor %vm391, %vm551
        %vm648 = vmor %vm392, %vm552
        %vm649 = vmor %vm393, %vm553
        %v650 = vadd.s32 %v227, 512
        %v651 = vadd.s32 %v228, 512
        %v652 = vadd.s32 %v229, 512
        %v653 = vadd.s32 %v230, 512
        %v654 = vadd.s32 %v231, 512
        %v655 = vadd.s32 %v232, 512
        %v656 = vadd.s32 %v233, 512
        %v657 = vadd.s32 %v234, 512
        %v658 = vadd.s32 %v235, 512
        %v659 = vadd.s32 %v236, 512
        %v660 = vadd.s32 %v237, 512
        %v661 = vadd.s32 %v238, 512
        %v662 = vadd.s32 %v239, 512
        %v663 = vadd.s32 %v240, 512
        %v664 = vadd.s32 %v241, 512
        %v665 = vadd.s32 %v242, 512
        %666 = vset.pattern.permute.xlu0 2
        %667 = vperm.xlu0 %666, %v650
        %v668 = vpop.permute.xlu0 %667
        %669 = vset.pattern.permute.xlu0 2
        %670 = vperm.xlu0 %669, %v651
        %v671 = vpop.permute.xlu0 %670
        %672 = vset.pattern.permute.xlu0 2
        %673 = vperm.xlu0 %672, %v652
        %v674 = vpop.permute.xlu0 %673
        %675 = vset.pattern.permute.xlu0 2
        %676 = vperm.xlu0 %675, %v653
        %v677 = vpop.permute.xlu0 %676
        %678 = vset.pattern.permute.xlu0 2
        %679 = vperm.xlu0 %678, %v654
        %v680 = vpop.permute.xlu0 %679
        %681 = vset.pattern.permute.xlu0 2
        %682 = vperm.xlu0 %681, %v655
        %v683 = vpop.permute.xlu0 %682
        %684 = vset.pattern.permute.xlu0 2
        %685 = vperm.xlu0 %684, %v656
        %v686 = vpop.permute.xlu0 %685
        %687 = vset.pattern.permute.xlu0 2
        %688 = vperm.xlu0 %687, %v657
        %v689 = vpop.permute.xlu0 %688
        %690 = vset.pattern.permute.xlu0 2
        %691 = vperm.xlu0 %690, %v658
        %v692 = vpop.permute.xlu0 %691
        %693 = vset.pattern.permute.xlu0 2
        %694 = vperm.xlu0 %693, %v659
        %v695 = vpop.permute.xlu0 %694
        %696 = vset.pattern.permute.xlu0 2
        %697 = vperm.xlu0 %696, %v660
        %v698 = vpop.permute.xlu0 %697
        %699 = vset.pattern.permute.xlu0 2
        %700 = vperm.xlu0 %699, %v661
        %v701 = vpop.permute.xlu0 %700
        %702 = vset.pattern.permute.xlu0 2
        %703 = vperm.xlu0 %702, %v662
        %v704 = vpop.permute.xlu0 %703
        %705 = vset.pattern.permute.xlu0 2
        %706 = vperm.xlu0 %705, %v663
        %v707 = vpop.permute.xlu0 %706
        %708 = vset.pattern.permute.xlu0 2
        %709 = vperm.xlu0 %708, %v664
        %v710 = vpop.permute.xlu0 %709
        %711 = vset.pattern.permute.xlu0 2
        %712 = vperm.xlu0 %711, %v665
        %v713 = vpop.permute.xlu0 %712
        %vm714 = vcmp.eq.s32.totalorder %v244, %v668
        %vm715 = vcmp.eq.s32.totalorder %v245, %v668
        %vm716 = vcmp.eq.s32.totalorder %v246, %v668
        %vm717 = vcmp.eq.s32.totalorder %v247, %v668
        %vm718 = vcmp.eq.s32.totalorder %v248, %v668
        %vm719 = vcmp.eq.s32.totalorder %v249, %v668
        %vm720 = vcmp.eq.s32.totalorder %v244, %v671
        %vm721 = vcmp.eq.s32.totalorder %v245, %v671
        %vm722 = vcmp.eq.s32.totalorder %v246, %v671
        %vm723 = vcmp.eq.s32.totalorder %v247, %v671
        %vm724 = vcmp.eq.s32.totalorder %v248, %v671
        %vm725 = vcmp.eq.s32.totalorder %v249, %v671
        %vm726 = vcmp.eq.s32.totalorder %v244, %v674
        %vm727 = vcmp.eq.s32.totalorder %v245, %v674
        %vm728 = vcmp.eq.s32.totalorder %v246, %v674
        %vm729 = vcmp.eq.s32.totalorder %v247, %v674
        %vm730 = vcmp.eq.s32.totalorder %v248, %v674
        %vm731 = vcmp.eq.s32.totalorder %v249, %v674
        %vm732 = vcmp.eq.s32.totalorder %v244, %v677
        %vm733 = vcmp.eq.s32.totalorder %v245, %v677
        %vm734 = vcmp.eq.s32.totalorder %v246, %v677
        %vm735 = vcmp.eq.s32.totalorder %v247, %v677
        %vm736 = vcmp.eq.s32.totalorder %v248, %v677
        %vm737 = vcmp.eq.s32.totalorder %v249, %v677
        %vm738 = vcmp.eq.s32.totalorder %v244, %v680
        %vm739 = vcmp.eq.s32.totalorder %v245, %v680
        %vm740 = vcmp.eq.s32.totalorder %v246, %v680
        %vm741 = vcmp.eq.s32.totalorder %v247, %v680
        %vm742 = vcmp.eq.s32.totalorder %v248, %v680
        %vm743 = vcmp.eq.s32.totalorder %v249, %v680
        %vm744 = vcmp.eq.s32.totalorder %v244, %v683
        %vm745 = vcmp.eq.s32.totalorder %v245, %v683
        %vm746 = vcmp.eq.s32.totalorder %v246, %v683
        %vm747 = vcmp.eq.s32.totalorder %v247, %v683
        %vm748 = vcmp.eq.s32.totalorder %v248, %v683
        %vm749 = vcmp.eq.s32.totalorder %v249, %v683
        %vm750 = vcmp.eq.s32.totalorder %v244, %v686
        %vm751 = vcmp.eq.s32.totalorder %v245, %v686
        %vm752 = vcmp.eq.s32.totalorder %v246, %v686
        %vm753 = vcmp.eq.s32.totalorder %v247, %v686
        %vm754 = vcmp.eq.s32.totalorder %v248, %v686
        %vm755 = vcmp.eq.s32.totalorder %v249, %v686
        %vm756 = vcmp.eq.s32.totalorder %v244, %v689
        %vm757 = vcmp.eq.s32.totalorder %v245, %v689
        %vm758 = vcmp.eq.s32.totalorder %v246, %v689
        %vm759 = vcmp.eq.s32.totalorder %v247, %v689
        %vm760 = vcmp.eq.s32.totalorder %v248, %v689
        %vm761 = vcmp.eq.s32.totalorder %v249, %v689
        %vm762 = vcmp.eq.s32.totalorder %v244, %v692
        %vm763 = vcmp.eq.s32.totalorder %v245, %v692
        %vm764 = vcmp.eq.s32.totalorder %v246, %v692
        %vm765 = vcmp.eq.s32.totalorder %v247, %v692
        %vm766 = vcmp.eq.s32.totalorder %v248, %v692
        %vm767 = vcmp.eq.s32.totalorder %v249, %v692
        %vm768 = vcmp.eq.s32.totalorder %v244, %v695
        %vm769 = vcmp.eq.s32.totalorder %v245, %v695
        %vm770 = vcmp.eq.s32.totalorder %v246, %v695
        %vm771 = vcmp.eq.s32.totalorder %v247, %v695
        %vm772 = vcmp.eq.s32.totalorder %v248, %v695
        %vm773 = vcmp.eq.s32.totalorder %v249, %v695
        %vm774 = vcmp.eq.s32.totalorder %v244, %v698
        %vm775 = vcmp.eq.s32.totalorder %v245, %v698
        %vm776 = vcmp.eq.s32.totalorder %v246, %v698
        %vm777 = vcmp.eq.s32.totalorder %v247, %v698
        %vm778 = vcmp.eq.s32.totalorder %v248, %v698
        %vm779 = vcmp.eq.s32.totalorder %v249, %v698
        %vm780 = vcmp.eq.s32.totalorder %v244, %v701
        %vm781 = vcmp.eq.s32.totalorder %v245, %v701
        %vm782 = vcmp.eq.s32.totalorder %v246, %v701
        %vm783 = vcmp.eq.s32.totalorder %v247, %v701
        %vm784 = vcmp.eq.s32.totalorder %v248, %v701
        %vm785 = vcmp.eq.s32.totalorder %v249, %v701
        %vm786 = vcmp.eq.s32.totalorder %v244, %v704
        %vm787 = vcmp.eq.s32.totalorder %v245, %v704
        %vm788 = vcmp.eq.s32.totalorder %v246, %v704
        %vm789 = vcmp.eq.s32.totalorder %v247, %v704
        %vm790 = vcmp.eq.s32.totalorder %v248, %v704
        %vm791 = vcmp.eq.s32.totalorder %v249, %v704
        %vm792 = vcmp.eq.s32.totalorder %v244, %v707
        %vm793 = vcmp.eq.s32.totalorder %v245, %v707
        %vm794 = vcmp.eq.s32.totalorder %v246, %v707
        %vm795 = vcmp.eq.s32.totalorder %v247, %v707
        %vm796 = vcmp.eq.s32.totalorder %v248, %v707
        %vm797 = vcmp.eq.s32.totalorder %v249, %v707
        %vm798 = vcmp.eq.s32.totalorder %v244, %v710
        %vm799 = vcmp.eq.s32.totalorder %v245, %v710
        %vm800 = vcmp.eq.s32.totalorder %v246, %v710
        %vm801 = vcmp.eq.s32.totalorder %v247, %v710
        %vm802 = vcmp.eq.s32.totalorder %v248, %v710
        %vm803 = vcmp.eq.s32.totalorder %v249, %v710
        %vm804 = vcmp.eq.s32.totalorder %v244, %v713
        %vm805 = vcmp.eq.s32.totalorder %v245, %v713
        %vm806 = vcmp.eq.s32.totalorder %v246, %v713
        %vm807 = vcmp.eq.s32.totalorder %v247, %v713
        %vm808 = vcmp.eq.s32.totalorder %v248, %v713
        %vm809 = vcmp.eq.s32.totalorder %v249, %v713
        %vm810 = vmor %vm554, %vm714
        %vm811 = vmor %vm555, %vm715
        %vm812 = vmor %vm556, %vm716
        %vm813 = vmor %vm557, %vm717
        %vm814 = vmor %vm558, %vm718
        %vm815 = vmor %vm559, %vm719
        %vm816 = vmor %vm560, %vm720
        %vm817 = vmor %vm561, %vm721
        %vm818 = vmor %vm562, %vm722
        %vm819 = vmor %vm563, %vm723
        %vm820 = vmor %vm564, %vm724
        %vm821 = vmor %vm565, %vm725
        %vm822 = vmor %vm566, %vm726
        %vm823 = vmor %vm567, %vm727
        %vm824 = vmor %vm568, %vm728
        %vm825 = vmor %vm569, %vm729
        %vm826 = vmor %vm570, %vm730
        %vm827 = vmor %vm571, %vm731
        %vm828 = vmor %vm572, %vm732
        %vm829 = vmor %vm573, %vm733
        %vm830 = vmor %vm574, %vm734
        %vm831 = vmor %vm575, %vm735
        %vm832 = vmor %vm576, %vm736
        %vm833 = vmor %vm577, %vm737
        %vm834 = vmor %vm578, %vm738
        %vm835 = vmor %vm579, %vm739
        %vm836 = vmor %vm580, %vm740
        %vm837 = vmor %vm581, %vm741
        %vm838 = vmor %vm582, %vm742
        %vm839 = vmor %vm583, %vm743
        %vm840 = vmor %vm584, %vm744
        %vm841 = vmor %vm585, %vm745
        %vm842 = vmor %vm586, %vm746
        %vm843 = vmor %vm587, %vm747
        %vm844 = vmor %vm588, %vm748
        %vm845 = vmor %vm589, %vm749
        %vm846 = vmor %vm590, %vm750
        %vm847 = vmor %vm591, %vm751
        %vm848 = vmor %vm592, %vm752
        %vm849 = vmor %vm593, %vm753
        %vm850 = vmor %vm594, %vm754
        %vm851 = vmor %vm595, %vm755
        %vm852 = vmor %vm596, %vm756
        %vm853 = vmor %vm597, %vm757
        %vm854 = vmor %vm598, %vm758
        %vm855 = vmor %vm599, %vm759
        %vm856 = vmor %vm600, %vm760
        %vm857 = vmor %vm601, %vm761
        %vm858 = vmor %vm602, %vm762
        %vm859 = vmor %vm603, %vm763
        %vm860 = vmor %vm604, %vm764
        %vm861 = vmor %vm605, %vm765
        %vm862 = vmor %vm606, %vm766
        %vm863 = vmor %vm607, %vm767
        %vm864 = vmor %vm608, %vm768
        %vm865 = vmor %vm609, %vm769
        %vm866 = vmor %vm610, %vm770
        %vm867 = vmor %vm611, %vm771
        %vm868 = vmor %vm612, %vm772
        %vm869 = vmor %vm613, %vm773
        %vm870 = vmor %vm614, %vm774
        %vm871 = vmor %vm615, %vm775
        %vm872 = vmor %vm616, %vm776
        %vm873 = vmor %vm617, %vm777
        %vm874 = vmor %vm618, %vm778
        %vm875 = vmor %vm619, %vm779
        %vm876 = vmor %vm620, %vm780
        %vm877 = vmor %vm621, %vm781
        %vm878 = vmor %vm622, %vm782
        %vm879 = vmor %vm623, %vm783
        %vm880 = vmor %vm624, %vm784
        %vm881 = vmor %vm625, %vm785
        %vm882 = vmor %vm626, %vm786
        %vm883 = vmor %vm627, %vm787
        %vm884 = vmor %vm628, %vm788
        %vm885 = vmor %vm629, %vm789
        %vm886 = vmor %vm630, %vm790
        %vm887 = vmor %vm631, %vm791
        %vm888 = vmor %vm632, %vm792
        %vm889 = vmor %vm633, %vm793
        %vm890 = vmor %vm634, %vm794
        %vm891 = vmor %vm635, %vm795
        %vm892 = vmor %vm636, %vm796
        %vm893 = vmor %vm637, %vm797
        %vm894 = vmor %vm638, %vm798
        %vm895 = vmor %vm639, %vm799
        %vm896 = vmor %vm640, %vm800
        %vm897 = vmor %vm641, %vm801
        %vm898 = vmor %vm642, %vm802
        %vm899 = vmor %vm643, %vm803
        %vm900 = vmor %vm644, %vm804
        %vm901 = vmor %vm645, %vm805
        %vm902 = vmor %vm646, %vm806
        %vm903 = vmor %vm647, %vm807
        %vm904 = vmor %vm648, %vm808
        %vm905 = vmor %vm649, %vm809
        %v906 = vsel %vm810, 1, 0
        %v907 = vsel %vm811, 1, 0
        %v908 = vsel %vm812, 1, 0
        %v909 = vsel %vm813, 1, 0
        %v910 = vsel %vm814, 1, 0
        %v911 = vsel %vm815, 1, 0
        %v912 = vsel %vm816, 1, 0
        %v913 = vsel %vm817, 1, 0
        %v914 = vsel %vm818, 1, 0
        %v915 = vsel %vm819, 1, 0
        %v916 = vsel %vm820, 1, 0
        %v917 = vsel %vm821, 1, 0
        %v918 = vsel %vm822, 1, 0
        %v919 = vsel %vm823, 1, 0
        %v920 = vsel %vm824, 1, 0
        %v921 = vsel %vm825, 1, 0
        %v922 = vsel %vm826, 1, 0
        %v923 = vsel %vm827, 1, 0
        %v924 = vsel %vm828, 1, 0
        %v925 = vsel %vm829, 1, 0
        %v926 = vsel %vm830, 1, 0
        %v927 = vsel %vm831, 1, 0
        %v928 = vsel %vm832, 1, 0
        %v929 = vsel %vm833, 1, 0
        %v930 = vsel %vm834, 1, 0
        %v931 = vsel %vm835, 1, 0
        %v932 = vsel %vm836, 1, 0
        %v933 = vsel %vm837, 1, 0
        %v934 = vsel %vm838, 1, 0
        %v935 = vsel %vm839, 1, 0
        %v936 = vsel %vm840, 1, 0
        %v937 = vsel %vm841, 1, 0
        %v938 = vsel %vm842, 1, 0
        %v939 = vsel %vm843, 1, 0
        %v940 = vsel %vm844, 1, 0
        %v941 = vsel %vm845, 1, 0
        %v942 = vsel %vm846, 1, 0
        %v943 = vsel %vm847, 1, 0
        %v944 = vsel %vm848, 1, 0
        %v945 = vsel %vm849, 1, 0
        %v946 = vsel %vm850, 1, 0
        %v947 = vsel %vm851, 1, 0
        %v948 = vsel %vm852, 1, 0
        %v949 = vsel %vm853, 1, 0
        %v950 = vsel %vm854, 1, 0
        %v951 = vsel %vm855, 1, 0
        %v952 = vsel %vm856, 1, 0
        %v953 = vsel %vm857, 1, 0
        %v954 = vsel %vm858, 1, 0
        %v955 = vsel %vm859, 1, 0
        %v956 = vsel %vm860, 1, 0
        %v957 = vsel %vm861, 1, 0
        %v958 = vsel %vm862, 1, 0
        %v959 = vsel %vm863, 1, 0
        %v960 = vsel %vm864, 1, 0
        %v961 = vsel %vm865, 1, 0
        %v962 = vsel %vm866, 1, 0
        %v963 = vsel %vm867, 1, 0
        %v964 = vsel %vm868, 1, 0
        %v965 = vsel %vm869, 1, 0
        %v966 = vsel %vm870, 1, 0
        %v967 = vsel %vm871, 1, 0
        %v968 = vsel %vm872, 1, 0
        %v969 = vsel %vm873, 1, 0
        %v970 = vsel %vm874, 1, 0
        %v971 = vsel %vm875, 1, 0
        %v972 = vsel %vm876, 1, 0
        %v973 = vsel %vm877, 1, 0
        %v974 = vsel %vm878, 1, 0
        %v975 = vsel %vm879, 1, 0
        %v976 = vsel %vm880, 1, 0
        %v977 = vsel %vm881, 1, 0
        %v978 = vsel %vm882, 1, 0
        %v979 = vsel %vm883, 1, 0
        %v980 = vsel %vm884, 1, 0
        %v981 = vsel %vm885, 1, 0
        %v982 = vsel %vm886, 1, 0
        %v983 = vsel %vm887, 1, 0
        %v984 = vsel %vm888, 1, 0
        %v985 = vsel %vm889, 1, 0
        %v986 = vsel %vm890, 1, 0
        %v987 = vsel %vm891, 1, 0
        %v988 = vsel %vm892, 1, 0
        %v989 = vsel %vm893, 1, 0
        %v990 = vsel %vm894, 1, 0
        %v991 = vsel %vm895, 1, 0
        %v992 = vsel %vm896, 1, 0
        %v993 = vsel %vm897, 1, 0
        %v994 = vsel %vm898, 1, 0
        %v995 = vsel %vm899, 1, 0
        %v996 = vsel %vm900, 1, 0
        %v997 = vsel %vm901, 1, 0
        %v998 = vsel %vm902, 1, 0
        %v999 = vsel %vm903, 1, 0
        %v1000 = vsel %vm904, 1, 0
        %v1001 = vsel %vm905, 1, 0
        %v1002 = vcvt.s32.f32 %v906
        %v1003 = vcvt.s32.f32 %v907
        %v1004 = vcvt.s32.f32 %v908
        %v1005 = vcvt.s32.f32 %v909
        %v1006 = vcvt.s32.f32 %v910
        %v1007 = vcvt.s32.f32 %v911
        %v1008 = vcvt.s32.f32 %v912
        %v1009 = vcvt.s32.f32 %v913
        %v1010 = vcvt.s32.f32 %v914
        %v1011 = vcvt.s32.f32 %v915
        %v1012 = vcvt.s32.f32 %v916
        %v1013 = vcvt.s32.f32 %v917
        %v1014 = vcvt.s32.f32 %v918
        %v1015 = vcvt.s32.f32 %v919
        %v1016 = vcvt.s32.f32 %v920
        %v1017 = vcvt.s32.f32 %v921
        %v1018 = vcvt.s32.f32 %v922
        %v1019 = vcvt.s32.f32 %v923
        %v1020 = vcvt.s32.f32 %v924
        %v1021 = vcvt.s32.f32 %v925
        %v1022 = vcvt.s32.f32 %v926
        %v1023 = vcvt.s32.f32 %v927
        %v1024 = vcvt.s32.f32 %v928
        %v1025 = vcvt.s32.f32 %v929
        %v1026 = vcvt.s32.f32 %v930
        %v1027 = vcvt.s32.f32 %v931
        %v1028 = vcvt.s32.f32 %v932
        %v1029 = vcvt.s32.f32 %v933
        %v1030 = vcvt.s32.f32 %v934
        %v1031 = vcvt.s32.f32 %v935
        %v1032 = vcvt.s32.f32 %v936
        %v1033 = vcvt.s32.f32 %v937
        %v1034 = vcvt.s32.f32 %v938
        %v1035 = vcvt.s32.f32 %v939
        %v1036 = vcvt.s32.f32 %v940
        %v1037 = vcvt.s32.f32 %v941
        %v1038 = vcvt.s32.f32 %v942
        %v1039 = vcvt.s32.f32 %v943
        %v1040 = vcvt.s32.f32 %v944
        %v1041 = vcvt.s32.f32 %v945
        %v1042 = vcvt.s32.f32 %v946
        %v1043 = vcvt.s32.f32 %v947
        %v1044 = vcvt.s32.f32 %v948
        %v1045 = vcvt.s32.f32 %v949
        %v1046 = vcvt.s32.f32 %v950
        %v1047 = vcvt.s32.f32 %v951
        %v1048 = vcvt.s32.f32 %v952
        %v1049 = vcvt.s32.f32 %v953
        %v1050 = vcvt.s32.f32 %v954
        %v1051 = vcvt.s32.f32 %v955
        %v1052 = vcvt.s32.f32 %v956
        %v1053 = vcvt.s32.f32 %v957
        %v1054 = vcvt.s32.f32 %v958
        %v1055 = vcvt.s32.f32 %v959
        %v1056 = vcvt.s32.f32 %v960
        %v1057 = vcvt.s32.f32 %v961
        %v1058 = vcvt.s32.f32 %v962
        %v1059 = vcvt.s32.f32 %v963
        %v1060 = vcvt.s32.f32 %v964
        %v1061 = vcvt.s32.f32 %v965
        %v1062 = vcvt.s32.f32 %v966
        %v1063 = vcvt.s32.f32 %v967
        %v1064 = vcvt.s32.f32 %v968
        %v1065 = vcvt.s32.f32 %v969
        %v1066 = vcvt.s32.f32 %v970
        %v1067 = vcvt.s32.f32 %v971
        %v1068 = vcvt.s32.f32 %v972
        %v1069 = vcvt.s32.f32 %v973
        %v1070 = vcvt.s32.f32 %v974
        %v1071 = vcvt.s32.f32 %v975
        %v1072 = vcvt.s32.f32 %v976
        %v1073 = vcvt.s32.f32 %v977
        %v1074 = vcvt.s32.f32 %v978
        %v1075 = vcvt.s32.f32 %v979
        %v1076 = vcvt.s32.f32 %v980
        %v1077 = vcvt.s32.f32 %v981
        %v1078 = vcvt.s32.f32 %v982
        %v1079 = vcvt.s32.f32 %v983
        %v1080 = vcvt.s32.f32 %v984
        %v1081 = vcvt.s32.f32 %v985
        %v1082 = vcvt.s32.f32 %v986
        %v1083 = vcvt.s32.f32 %v987
        %v1084 = vcvt.s32.f32 %v988
        %v1085 = vcvt.s32.f32 %v989
        %v1086 = vcvt.s32.f32 %v990
        %v1087 = vcvt.s32.f32 %v991
        %v1088 = vcvt.s32.f32 %v992
        %v1089 = vcvt.s32.f32 %v993
        %v1090 = vcvt.s32.f32 %v994
        %v1091 = vcvt.s32.f32 %v995
        %v1092 = vcvt.s32.f32 %v996
        %v1093 = vcvt.s32.f32 %v997
        %v1094 = vcvt.s32.f32 %v998
        %v1095 = vcvt.s32.f32 %v999
        %v1096 = vcvt.s32.f32 %v1000
        %v1097 = vcvt.s32.f32 %v1001
        %v1098 = vpack.c.bf16 %v1008, %v1002
        %v1099 = vpack.c.bf16 %v1009, %v1003
        %v1100 = vpack.c.bf16 %v1010, %v1004
        %v1101 = vpack.c.bf16 %v1011, %v1005
        %v1102 = vpack.c.bf16 %v1012, %v1006
        %v1103 = vpack.c.bf16 %v1013, %v1007
        %v1104 = vpack.c.bf16 %v1020, %v1014
        %v1105 = vpack.c.bf16 %v1021, %v1015
        %v1106 = vpack.c.bf16 %v1022, %v1016
        %v1107 = vpack.c.bf16 %v1023, %v1017
        %v1108 = vpack.c.bf16 %v1024, %v1018
        %v1109 = vpack.c.bf16 %v1025, %v1019
        %v1110 = vpack.c.bf16 %v1032, %v1026
        %v1111 = vpack.c.bf16 %v1033, %v1027
        %v1112 = vpack.c.bf16 %v1034, %v1028
        %v1113 = vpack.c.bf16 %v1035, %v1029
        %v1114 = vpack.c.bf16 %v1036, %v1030
        %v1115 = vpack.c.bf16 %v1037, %v1031
        %v1116 = vpack.c.bf16 %v1044, %v1038
        %v1117 = vpack.c.bf16 %v1045, %v1039
        %v1118 = vpack.c.bf16 %v1046, %v1040
        %v1119 = vpack.c.bf16 %v1047, %v1041
        %v1120 = vpack.c.bf16 %v1048, %v1042
        %v1121 = vpack.c.bf16 %v1049, %v1043
        %v1122 = vpack.c.bf16 %v1056, %v1050
        %v1123 = vpack.c.bf16 %v1057, %v1051
        %v1124 = vpack.c.bf16 %v1058, %v1052
        %v1125 = vpack.c.bf16 %v1059, %v1053
        %v1126 = vpack.c.bf16 %v1060, %v1054
        %v1127 = vpack.c.bf16 %v1061, %v1055
        %v1128 = vpack.c.bf16 %v1068, %v1062
        %v1129 = vpack.c.bf16 %v1069, %v1063
        %v1130 = vpack.c.bf16 %v1070, %v1064
        %v1131 = vpack.c.bf16 %v1071, %v1065
        %v1132 = vpack.c.bf16 %v1072, %v1066
        %v1133 = vpack.c.bf16 %v1073, %v1067
        %v1134 = vpack.c.bf16 %v1080, %v1074
        %v1135 = vpack.c.bf16 %v1081, %v1075
        %v1136 = vpack.c.bf16 %v1082, %v1076
        %v1137 = vpack.c.bf16 %v1083, %v1077
        %v1138 = vpack.c.bf16 %v1084, %v1078
        %v1139 = vpack.c.bf16 %v1085, %v1079
        %v1140 = vpack.c.bf16 %v1092, %v1086
        %v1141 = vpack.c.bf16 %v1093, %v1087
        %v1142 = vpack.c.bf16 %v1094, %v1088
        %v1143 = vpack.c.bf16 %v1095, %v1089
        %v1144 = vpack.c.bf16 %v1096, %v1090
        %v1145 = vpack.c.bf16 %v1097, %v1091
        %v1146 = vld [vmem:[%s1] sm:$0xf]
        %v1147 = vld [vmem:[%s1 + $0x4] sm:$0xf]
        %v1148 = vld [vmem:[%s1 + $0x8] sm:$0xf]
        %v1149 = vld [vmem:[%s1 + $0xc] sm:$0xf]
        %v1150 = vld [vmem:[%s1 + $0x10] sm:$0xf]
        %v1151 = vld [vmem:[%s1 + $0x14] sm:$0xf]
        %v1152 = vld [vmem:[%s1 + $0x18] sm:$0xf]
        %v1153 = vld [vmem:[%s1 + $0x1c] sm:$0xf]
        %v1154 = vld [vmem:[%s1 + $0x20] sm:$0xf]
        %v1155 = vld [vmem:[%s1 + $0x24] sm:$0xf]
        %v1156 = vld [vmem:[%s1 + $0x28] sm:$0xf]
        %v1157 = vld [vmem:[%s1 + $0x2c] sm:$0xf]
        %v1158 = vld [vmem:[%s1 + $0x30] sm:$0xf]
        %v1159 = vld [vmem:[%s1 + $0x34] sm:$0xf]
        %v1160 = vld [vmem:[%s1 + $0x38] sm:$0xf]
        %v1161 = vld [vmem:[%s1 + $0x3c] sm:$0xf]
        %v1162 = vld [vmem:[%s1 + $0x40] sm:$0xf]
        %v1163 = vld [vmem:[%s1 + $0x44] sm:$0xf]
        %v1164 = vld [vmem:[%s1 + $0x48] sm:$0xf]
        %v1165 = vld [vmem:[%s1 + $0x4c] sm:$0xf]
        %v1166 = vld [vmem:[%s1 + $0x50] sm:$0xf]
        %v1167 = vld [vmem:[%s1 + $0x54] sm:$0xf]
        %v1168 = vld [vmem:[%s1 + $0x58] sm:$0xf]
        %v1169 = vld [vmem:[%s1 + $0x5c] sm:$0xf]
        %v1170 = vld [vmem:[%s1 + $0x60] sm:$0xf]
        %v1171 = vld [vmem:[%s1 + $0x64] sm:$0xf]
        %v1172 = vld [vmem:[%s1 + $0x68] sm:$0xf]
        %v1173 = vld [vmem:[%s1 + $0x6c] sm:$0xf]
        %v1174 = vld [vmem:[%s1 + $0x70] sm:$0xf]
        %v1175 = vld [vmem:[%s1 + $0x74] sm:$0xf]
        %v1176 = vld [vmem:[%s1 + $0x78] sm:$0xf]
        %v1177 = vld [vmem:[%s1 + $0x7c] sm:$0xf]
        %v1178 = vld [vmem:[%s1 + $0x80] sm:$0xf]
        %v1179 = vld [vmem:[%s1 + $0x84] sm:$0xf]
        %v1180 = vld [vmem:[%s1 + $0x88] sm:$0xf]
        %v1181 = vld [vmem:[%s1 + $0x8c] sm:$0xf]
        %v1182 = vld [vmem:[%s1 + $0x90] sm:$0xf]
        %v1183 = vld [vmem:[%s1 + $0x94] sm:$0xf]
        %v1184 = vld [vmem:[%s1 + $0x98] sm:$0xf]
        %v1185 = vld [vmem:[%s1 + $0x9c] sm:$0xf]
        %v1186 = vld [vmem:[%s1 + $0xa0] sm:$0xf]
        %v1187 = vld [vmem:[%s1 + $0xa4] sm:$0xf]
        %v1188 = vld [vmem:[%s1 + $0xa8] sm:$0xf]
        %v1189 = vld [vmem:[%s1 + $0xac] sm:$0xf]
        %v1190 = vld [vmem:[%s1 + $0xb0] sm:$0xf]
        %v1191 = vld [vmem:[%s1 + $0xb4] sm:$0xf]
        %v1192 = vld [vmem:[%s1 + $0xb8] sm:$0xf]
        %v1193 = vld [vmem:[%s1 + $0xbc] sm:$0xf]
        %v1194 = vld [vmem:[%s1 + $0xc0] sm:$0xf]
        %v1195 = vld [vmem:[%s1 + $0xc4] sm:$0xf]
        %v1196 = vld [vmem:[%s1 + $0xc8] sm:$0xf]
        %v1197 = vld [vmem:[%s1 + $0xcc] sm:$0xf]
        %v1198 = vld [vmem:[%s1 + $0xd0] sm:$0xf]
        %v1199 = vld [vmem:[%s1 + $0xd4] sm:$0xf]
        %v1200 = vld [vmem:[%s1 + $0xd8] sm:$0xf]
        %v1201 = vld [vmem:[%s1 + $0xdc] sm:$0xf]
        %v1202 = vld [vmem:[%s1 + $0xe0] sm:$0xf]
        %v1203 = vld [vmem:[%s1 + $0xe4] sm:$0xf]
        %v1204 = vld [vmem:[%s1 + $0xe8] sm:$0xf]
        %v1205 = vld [vmem:[%s1 + $0xec] sm:$0xf]
        %v1206 = vld [vmem:[%s1 + $0xf0] sm:$0xf]
        %v1207 = vld [vmem:[%s1 + $0xf4] sm:$0xf]
        %v1208 = vld [vmem:[%s1 + $0xf8] sm:$0xf]
        %v1209 = vld [vmem:[%s1 + $0xfc] sm:$0xf]
        %v1210 = vld [vmem:[%s1 + $0x100] sm:$0xf]
        %v1211 = vld [vmem:[%s1 + $0x104] sm:$0xf]
        %v1212 = vld [vmem:[%s1 + $0x108] sm:$0xf]
        %v1213 = vld [vmem:[%s1 + $0x10c] sm:$0xf]
        %v1214 = vld [vmem:[%s1 + $0x110] sm:$0xf]
        %v1215 = vld [vmem:[%s1 + $0x114] sm:$0xf]
        %v1216 = vld [vmem:[%s1 + $0x118] sm:$0xf]
        %v1217 = vld [vmem:[%s1 + $0x11c] sm:$0xf]
        %v1218 = vld [vmem:[%s1 + $0x120] sm:$0xf]
        %v1219 = vld [vmem:[%s1 + $0x124] sm:$0xf]
        %v1220 = vld [vmem:[%s1 + $0x128] sm:$0xf]
        %v1221 = vld [vmem:[%s1 + $0x12c] sm:$0xf]
        %v1222 = vld [vmem:[%s1 + $0x130] sm:$0xf]
        %v1223 = vld [vmem:[%s1 + $0x134] sm:$0xf]
        %v1224 = vld [vmem:[%s1 + $0x138] sm:$0xf]
        %v1225 = vld [vmem:[%s1 + $0x13c] sm:$0xf]
        %v1226 = vld [vmem:[%s1 + $0x140] sm:$0xf]
        %v1227 = vld [vmem:[%s1 + $0x144] sm:$0xf]
        %v1228 = vld [vmem:[%s1 + $0x148] sm:$0xf]
        %v1229 = vld [vmem:[%s1 + $0x14c] sm:$0xf]
        %v1230 = vld [vmem:[%s1 + $0x150] sm:$0xf]
        %v1231 = vld [vmem:[%s1 + $0x154] sm:$0xf]
        %v1232 = vld [vmem:[%s1 + $0x158] sm:$0xf]
        %v1233 = vld [vmem:[%s1 + $0x15c] sm:$0xf]
        %v1234 = vld [vmem:[%s1 + $0x160] sm:$0xf]
        %v1235 = vld [vmem:[%s1 + $0x164] sm:$0xf]
        %v1236 = vld [vmem:[%s1 + $0x168] sm:$0xf]
        %v1237 = vld [vmem:[%s1 + $0x16c] sm:$0xf]
        %v1238 = vld [vmem:[%s1 + $0x170] sm:$0xf]
        %v1239 = vld [vmem:[%s1 + $0x174] sm:$0xf]
        %v1240 = vld [vmem:[%s1 + $0x178] sm:$0xf]
        %v1241 = vld [vmem:[%s1 + $0x17c] sm:$0xf]
        %v1242 = vld [vmem:[%s2] sm:$0x1]
        %v1244 = vlaneseq
        %v1245 = vshrl.u32 %v1244, 7
        %v1246 = vsub.s32 0, %v1245
        %v1247 = vrot.slane %v1242, %v1246
        %v1345 = vunpack.c.l.b16 %v1146
        %v1346 = vunpack.c.l.b16 %v1147
        %v1347 = vunpack.c.l.b16 %v1148
        %v1348 = vunpack.c.l.b16 %v1149
        %v1349 = vunpack.c.l.b16 %v1150
        %v1350 = vunpack.c.l.b16 %v1151
        %v1351 = vunpack.c.l.b16 %v1152
        %v1352 = vunpack.c.l.b16 %v1153
        %v1353 = vunpack.c.l.b16 %v1154
        %v1354 = vunpack.c.l.b16 %v1155
        %v1355 = vunpack.c.l.b16 %v1156
        %v1356 = vunpack.c.l.b16 %v1157
        %v1357 = vunpack.c.l.b16 %v1158
        %v1358 = vunpack.c.l.b16 %v1159
        %v1359 = vunpack.c.l.b16 %v1160
        %v1360 = vunpack.c.l.b16 %v1161
        %v1361 = vunpack.c.l.b16 %v1162
        %v1362 = vunpack.c.l.b16 %v1163
        %v1363 = vunpack.c.l.b16 %v1164
        %v1364 = vunpack.c.l.b16 %v1165
        %v1365 = vunpack.c.l.b16 %v1166
        %v1366 = vunpack.c.l.b16 %v1167
        %v1367 = vunpack.c.l.b16 %v1168
        %v1368 = vunpack.c.l.b16 %v1169
        %v1369 = vunpack.c.l.b16 %v1170
        %v1370 = vunpack.c.l.b16 %v1171
        %v1371 = vunpack.c.l.b16 %v1172
        %v1372 = vunpack.c.l.b16 %v1173
        %v1373 = vunpack.c.l.b16 %v1174
        %v1374 = vunpack.c.l.b16 %v1175
        %v1375 = vunpack.c.l.b16 %v1176
        %v1376 = vunpack.c.l.b16 %v1177
        %v1377 = vunpack.c.l.b16 %v1178
        %v1378 = vunpack.c.l.b16 %v1179
        %v1379 = vunpack.c.l.b16 %v1180
        %v1380 = vunpack.c.l.b16 %v1181
        %v1381 = vunpack.c.l.b16 %v1182
        %v1382 = vunpack.c.l.b16 %v1183
        %v1383 = vunpack.c.l.b16 %v1184
        %v1384 = vunpack.c.l.b16 %v1185
        %v1385 = vunpack.c.l.b16 %v1186
        %v1386 = vunpack.c.l.b16 %v1187
        %v1387 = vunpack.c.l.b16 %v1188
        %v1388 = vunpack.c.l.b16 %v1189
        %v1389 = vunpack.c.l.b16 %v1190
        %v1390 = vunpack.c.l.b16 %v1191
        %v1391 = vunpack.c.l.b16 %v1192
        %v1392 = vunpack.c.l.b16 %v1193
        %v1393 = vunpack.c.l.b16 %v1194
        %v1394 = vunpack.c.l.b16 %v1195
        %v1395 = vunpack.c.l.b16 %v1196
        %v1396 = vunpack.c.l.b16 %v1197
        %v1397 = vunpack.c.l.b16 %v1198
        %v1398 = vunpack.c.l.b16 %v1199
        %v1399 = vunpack.c.l.b16 %v1200
        %v1400 = vunpack.c.l.b16 %v1201
        %v1401 = vunpack.c.l.b16 %v1202
        %v1402 = vunpack.c.l.b16 %v1203
        %v1403 = vunpack.c.l.b16 %v1204
        %v1404 = vunpack.c.l.b16 %v1205
        %v1405 = vunpack.c.l.b16 %v1206
        %v1406 = vunpack.c.l.b16 %v1207
        %v1407 = vunpack.c.l.b16 %v1208
        %v1408 = vunpack.c.l.b16 %v1209
        %v1409 = vunpack.c.l.b16 %v1210
        %v1410 = vunpack.c.l.b16 %v1211
        %v1411 = vunpack.c.l.b16 %v1212
        %v1412 = vunpack.c.l.b16 %v1213
        %v1413 = vunpack.c.l.b16 %v1214
        %v1414 = vunpack.c.l.b16 %v1215
        %v1415 = vunpack.c.l.b16 %v1216
        %v1416 = vunpack.c.l.b16 %v1217
        %v1417 = vunpack.c.l.b16 %v1218
        %v1418 = vunpack.c.l.b16 %v1219
        %v1419 = vunpack.c.l.b16 %v1220
        %v1420 = vunpack.c.l.b16 %v1221
        %v1421 = vunpack.c.l.b16 %v1222
        %v1422 = vunpack.c.l.b16 %v1223
        %v1423 = vunpack.c.l.b16 %v1224
        %v1424 = vunpack.c.l.b16 %v1225
        %v1425 = vunpack.c.l.b16 %v1226
        %v1426 = vunpack.c.l.b16 %v1227
        %v1427 = vunpack.c.l.b16 %v1228
        %v1428 = vunpack.c.l.b16 %v1229
        %v1429 = vunpack.c.l.b16 %v1230
        %v1430 = vunpack.c.l.b16 %v1231
        %v1431 = vunpack.c.l.b16 %v1232
        %v1432 = vunpack.c.l.b16 %v1233
        %v1433 = vunpack.c.l.b16 %v1234
        %v1434 = vunpack.c.l.b16 %v1235
        %v1435 = vunpack.c.l.b16 %v1236
        %v1436 = vunpack.c.l.b16 %v1237
        %v1437 = vunpack.c.l.b16 %v1238
        %v1438 = vunpack.c.l.b16 %v1239
        %v1439 = vunpack.c.l.b16 %v1240
        %v1440 = vunpack.c.l.b16 %v1241
        %v1441 = vpack.c.b16 %v1346, %v1345
        %v1442 = vpack.c.b16 %v1348, %v1347
        %v1443 = vpack.c.b16 %v1350, %v1349
        %v1444 = vpack.c.b16 %v1352, %v1351
        %v1445 = vpack.c.b16 %v1354, %v1353
        %v1446 = vpack.c.b16 %v1356, %v1355
        %v1447 = vpack.c.b16 %v1358, %v1357
        %v1448 = vpack.c.b16 %v1360, %v1359
        %v1449 = vpack.c.b16 %v1362, %v1361
        %v1450 = vpack.c.b16 %v1364, %v1363
        %v1451 = vpack.c.b16 %v1366, %v1365
        %v1452 = vpack.c.b16 %v1368, %v1367
        %v1453 = vpack.c.b16 %v1370, %v1369
        %v1454 = vpack.c.b16 %v1372, %v1371
        %v1455 = vpack.c.b16 %v1374, %v1373
        %v1456 = vpack.c.b16 %v1376, %v1375
        %v1457 = vpack.c.b16 %v1378, %v1377
        %v1458 = vpack.c.b16 %v1380, %v1379
        %v1459 = vpack.c.b16 %v1382, %v1381
        %v1460 = vpack.c.b16 %v1384, %v1383
        %v1461 = vpack.c.b16 %v1386, %v1385
        %v1462 = vpack.c.b16 %v1388, %v1387
        %v1463 = vpack.c.b16 %v1390, %v1389
        %v1464 = vpack.c.b16 %v1392, %v1391
        %v1465 = vpack.c.b16 %v1394, %v1393
        %v1466 = vpack.c.b16 %v1396, %v1395
        %v1467 = vpack.c.b16 %v1398, %v1397
        %v1468 = vpack.c.b16 %v1400, %v1399
        %v1469 = vpack.c.b16 %v1402, %v1401
        %v1470 = vpack.c.b16 %v1404, %v1403
        %v1471 = vpack.c.b16 %v1406, %v1405
        %v1472 = vpack.c.b16 %v1408, %v1407
        %v1473 = vpack.c.b16 %v1410, %v1409
        %v1474 = vpack.c.b16 %v1412, %v1411
        %v1475 = vpack.c.b16 %v1414, %v1413
        %v1476 = vpack.c.b16 %v1416, %v1415
        %v1477 = vpack.c.b16 %v1418, %v1417
        %v1478 = vpack.c.b16 %v1420, %v1419
        %v1479 = vpack.c.b16 %v1422, %v1421
        %v1480 = vpack.c.b16 %v1424, %v1423
        %v1481 = vpack.c.b16 %v1426, %v1425
        %v1482 = vpack.c.b16 %v1428, %v1427
        %v1483 = vpack.c.b16 %v1430, %v1429
        %v1484 = vpack.c.b16 %v1432, %v1431
        %v1485 = vpack.c.b16 %v1434, %v1433
        %v1486 = vpack.c.b16 %v1436, %v1435
        %v1487 = vpack.c.b16 %v1438, %v1437
        %v1488 = vpack.c.b16 %v1440, %v1439
        %1537 = vmatprep.subr.bf16.mxu0 0
        %1538 = vmatpush1.bf16.msra.mxu0 %v1441
        %1539 = vmatprep.subr.bf16.mxu0 0
        %1540 = vmatpush1.bf16.msra.mxu0 %v1442
        %1541 = vmatprep.subr.bf16.mxu0 0
        %1542 = vmatpush1.bf16.msra.mxu0 %v1443
        %1543 = vmatprep.subr.bf16.mxu0 0
        %1544 = vmatpush1.bf16.msra.mxu0 %v1444
        %1545 = vmatprep.subr.bf16.mxu0 0
        %1546 = vmatpush1.bf16.msra.mxu0 %v1445
        %1547 = vmatprep.subr.bf16.mxu0 0
        %1548 = vmatpush1.bf16.msra.mxu0 %v1446
        %1549 = vmatprep.subr.bf16.mxu0 0
        %1550 = vmatpush1.bf16.msra.mxu0 %v1447
        %1551 = vmatprep.subr.bf16.mxu0 0
        %1552 = vmatpush1.bf16.msra.mxu0 %v1448
        %1553 = vmatprep.subr.bf16.mxu0 0
        %1554 = vmatpush1.bf16.msra.mxu0 %v1449
        %1555 = vmatprep.subr.bf16.mxu0 0
        %1556 = vmatpush1.bf16.msra.mxu0 %v1450
        %1557 = vmatprep.subr.bf16.mxu0 0
        %1558 = vmatpush1.bf16.msra.mxu0 %v1451
        %1559 = vmatprep.subr.bf16.mxu0 0
        %1560 = vmatpush1.bf16.msra.mxu0 %v1452
        %1561 = vmatprep.subr.bf16.mxu0 0
        %1562 = vmatpush1.bf16.msra.mxu0 %v1453
        %1563 = vmatprep.subr.bf16.mxu0 0
        %1564 = vmatpush1.bf16.msra.mxu0 %v1454
        %1565 = vmatprep.subr.bf16.mxu0 0
        %1566 = vmatpush1.bf16.msra.mxu0 %v1455
        %1567 = vmatprep.subr.bf16.mxu0 0
        %1568 = vmatpush1.bf16.msra.mxu0 %v1456
        %1569 = vmatprep.mubr.bf16.mxu0 %v1099
        %1570 = vmatmul.mubr.bf16.gmra.mrb[0].mxu0 %v1098
        %v1571 = vpop.f32.mrb[0].mxu0
        %v1572 = vadd.f32 %v1247, %v1571
        %v1573 = vpop.f32.mrb[0].mxu0
        %v1574 = vpop.f32.mrb[0].mxu0
        %v1575 = vadd.f32 %v1247, %v1574
        %v1576 = vpop.f32.mrb[0].mxu0
        %1577 = vmatprep.mubr.bf16.mxu0 %v1105
        %1578 = vmatmul.mubr.bf16.gmra.mrb[0].mxu0 %v1104
        %v1579 = vpop.f32.mrb[0].mxu0
        %v1580 = vadd.f32 %v1247, %v1579
        %v1581 = vpop.f32.mrb[0].mxu0
        %v1582 = vpop.f32.mrb[0].mxu0
        %v1583 = vadd.f32 %v1247, %v1582
        %v1584 = vpop.f32.mrb[0].mxu0
        %1585 = vmatprep.mubr.bf16.mxu0 %v1111
        %1586 = vmatmul.mubr.bf16.gmra.mrb[0].mxu0 %v1110
        %v1587 = vpop.f32.mrb[0].mxu0
        %v1588 = vadd.f32 %v1247, %v1587
        %v1589 = vpop.f32.mrb[0].mxu0
        %v1590 = vpop.f32.mrb[0].mxu0
        %v1591 = vadd.f32 %v1247, %v1590
        %v1592 = vpop.f32.mrb[0].mxu0
        %1593 = vmatprep.mubr.bf16.mxu0 %v1117
        %1594 = vmatmul.mubr.bf16.gmra.mrb[0].mxu0 %v1116
        %v1595 = vpop.f32.mrb[0].mxu0
        %v1596 = vadd.f32 %v1247, %v1595
        %v1597 = vpop.f32.mrb[0].mxu0
        %v1598 = vpop.f32.mrb[0].mxu0
        %v1599 = vadd.f32 %v1247, %v1598
        %v1600 = vpop.f32.mrb[0].mxu0
        %1601 = vmatprep.mubr.bf16.mxu0 %v1123
        %1602 = vmatmul.mubr.bf16.gmra.mrb[0].mxu0 %v1122
        %v1603 = vpop.f32.mrb[0].mxu0
        %v1604 = vadd.f32 %v1247, %v1603
        %v1605 = vpop.f32.mrb[0].mxu0
        %v1606 = vpop.f32.mrb[0].mxu0
        %v1607 = vadd.f32 %v1247, %v1606
        %v1608 = vpop.f32.mrb[0].mxu0
        %1609 = vmatprep.mubr.bf16.mxu0 %v1129
        %1610 = vmatmul.mubr.bf16.gmra.mrb[0].mxu0 %v1128
        %v1611 = vpop.f32.mrb[0].mxu0
        %v1612 = vadd.f32 %v1247, %v1611
        %v1613 = vpop.f32.mrb[0].mxu0
        %v1614 = vpop.f32.mrb[0].mxu0
        %v1615 = vadd.f32 %v1247, %v1614
        %v1616 = vpop.f32.mrb[0].mxu0
        %1617 = vmatprep.mubr.bf16.mxu0 %v1135
        %1618 = vmatmul.mubr.bf16.gmra.mrb[0].mxu0 %v1134
        %v1619 = vpop.f32.mrb[0].mxu0
        %v1620 = vadd.f32 %v1247, %v1619
        %v1621 = vpop.f32.mrb[0].mxu0
        %v1622 = vpop.f32.mrb[0].mxu0
        %v1623 = vadd.f32 %v1247, %v1622
        %v1624 = vpop.f32.mrb[0].mxu0
        %1625 = vmatprep.mubr.bf16.mxu0 %v1141
        %1626 = vmatmul.mubr.bf16.gmra.mrb[0].mxu0 %v1140
        %v1627 = vpop.f32.mrb[0].mxu0
        %v1628 = vadd.f32 %v1247, %v1627
        %v1629 = vpop.f32.mrb[0].mxu0
        %v1630 = vpop.f32.mrb[0].mxu0
        %v1631 = vadd.f32 %v1247, %v1630
        %v1632 = vpop.f32.mrb[0].mxu0
        %1633 = vdwg.mxu0
        %1634 = vmatprep.subr.bf16.mxu0 0
        %1635 = vmatpush1.bf16.msra.mxu0 %v1457
        %1636 = vmatprep.subr.bf16.mxu0 0
        %1637 = vmatpush1.bf16.msra.mxu0 %v1458
        %1638 = vmatprep.subr.bf16.mxu0 0
        %1639 = vmatpush1.bf16.msra.mxu0 %v1459
        %1640 = vmatprep.subr.bf16.mxu0 0
        %1641 = vmatpush1.bf16.msra.mxu0 %v1460
        %1642 = vmatprep.subr.bf16.mxu0 0
        %1643 = vmatpush1.bf16.msra.mxu0 %v1461
        %1644 = vmatprep.subr.bf16.mxu0 0
        %1645 = vmatpush1.bf16.msra.mxu0 %v1462
        %1646 = vmatprep.subr.bf16.mxu0 0
        %1647 = vmatpush1.bf16.msra.mxu0 %v1463
        %1648 = vmatprep.subr.bf16.mxu0 0
        %1649 = vmatpush1.bf16.msra.mxu0 %v1464
        %1650 = vmatprep.subr.bf16.mxu0 0
        %1651 = vmatpush1.bf16.msra.mxu0 %v1465
        %1652 = vmatprep.subr.bf16.mxu0 0
        %1653 = vmatpush1.bf16.msra.mxu0 %v1466
        %1654 = vmatprep.subr.bf16.mxu0 0
        %1655 = vmatpush1.bf16.msra.mxu0 %v1467
        %1656 = vmatprep.subr.bf16.mxu0 0
        %1657 = vmatpush1.bf16.msra.mxu0 %v1468
        %1658 = vmatprep.subr.bf16.mxu0 0
        %1659 = vmatpush1.bf16.msra.mxu0 %v1469
        %1660 = vmatprep.subr.bf16.mxu0 0
        %1661 = vmatpush1.bf16.msra.mxu0 %v1470
        %1662 = vmatprep.subr.bf16.mxu0 0
        %1663 = vmatpush1.bf16.msra.mxu0 %v1471
        %1664 = vmatprep.subr.bf16.mxu0 0
        %1665 = vmatpush1.bf16.msra.mxu0 %v1472
        %1666 = vmatprep.mubr.bf16.mxu0 %v1101
        %1667 = vmatmul.mubr.bf16.gmra.mrb[0].mxu0 %v1100
        %v1668 = vpop.f32.mrb[0].mxu0
        %v1669 = vadd.f32 %v1572, %v1668
        %v1670 = vpop.f32.mrb[0].mxu0
        %v1671 = vpop.f32.mrb[0].mxu0
        %v1672 = vadd.f32 %v1575, %v1671
        %v1673 = vpop.f32.mrb[0].mxu0
        %1674 = vmatprep.mubr.bf16.mxu0 %v1107
        %1675 = vmatmul.mubr.bf16.gmra.mrb[0].mxu0 %v1106
        %v1676 = vpop.f32.mrb[0].mxu0
        %v1677 = vadd.f32 %v1580, %v1676
        %v1678 = vpop.f32.mrb[0].mxu0
        %v1679 = vpop.f32.mrb[0].mxu0
        %v1680 = vadd.f32 %v1583, %v1679
        %v1681 = vpop.f32.mrb[0].mxu0
        %1682 = vmatprep.mubr.bf16.mxu0 %v1113
        %1683 = vmatmul.mubr.bf16.gmra.mrb[0].mxu0 %v1112
        %v1684 = vpop.f32.mrb[0].mxu0
        %v1685 = vadd.f32 %v1588, %v1684
        %v1686 = vpop.f32.mrb[0].mxu0
        %v1687 = vpop.f32.mrb[0].mxu0
        %v1688 = vadd.f32 %v1591, %v1687
        %v1689 = vpop.f32.mrb[0].mxu0
        %1690 = vmatprep.mubr.bf16.mxu0 %v1119
        %1691 = vmatmul.mubr.bf16.gmra.mrb[0].mxu0 %v1118
        %v1692 = vpop.f32.mrb[0].mxu0
        %v1693 = vadd.f32 %v1596, %v1692
        %v1694 = vpop.f32.mrb[0].mxu0
        %v1695 = vpop.f32.mrb[0].mxu0
        %v1696 = vadd.f32 %v1599, %v1695
        %v1697 = vpop.f32.mrb[0].mxu0
        %1698 = vmatprep.mubr.bf16.mxu0 %v1125
        %1699 = vmatmul.mubr.bf16.gmra.mrb[0].mxu0 %v1124
        %v1700 = vpop.f32.mrb[0].mxu0
        %v1701 = vadd.f32 %v1604, %v1700
        %v1702 = vpop.f32.mrb[0].mxu0
        %v1703 = vpop.f32.mrb[0].mxu0
        %v1704 = vadd.f32 %v1607, %v1703
        %v1705 = vpop.f32.mrb[0].mxu0
        %1706 = vmatprep.mubr.bf16.mxu0 %v1131
        %1707 = vmatmul.mubr.bf16.gmra.mrb[0].mxu0 %v1130
        %v1708 = vpop.f32.mrb[0].mxu0
        %v1709 = vadd.f32 %v1612, %v1708
        %v1710 = vpop.f32.mrb[0].mxu0
        %v1711 = vpop.f32.mrb[0].mxu0
        %v1712 = vadd.f32 %v1615, %v1711
        %v1713 = vpop.f32.mrb[0].mxu0
        %1714 = vmatprep.mubr.bf16.mxu0 %v1137
        %1715 = vmatmul.mubr.bf16.gmra.mrb[0].mxu0 %v1136
        %v1716 = vpop.f32.mrb[0].mxu0
        %v1717 = vadd.f32 %v1620, %v1716
        %v1718 = vpop.f32.mrb[0].mxu0
        %v1719 = vpop.f32.mrb[0].mxu0
        %v1720 = vadd.f32 %v1623, %v1719
        %v1721 = vpop.f32.mrb[0].mxu0
        %1722 = vmatprep.mubr.bf16.mxu0 %v1143
        %1723 = vmatmul.mubr.bf16.gmra.mrb[0].mxu0 %v1142
        %v1724 = vpop.f32.mrb[0].mxu0
        %v1725 = vadd.f32 %v1628, %v1724
        %v1726 = vpop.f32.mrb[0].mxu0
        %v1727 = vpop.f32.mrb[0].mxu0
        %v1728 = vadd.f32 %v1631, %v1727
        %v1729 = vpop.f32.mrb[0].mxu0
        %1730 = vdwg.mxu0
        %1731 = vmatprep.subr.bf16.mxu0 0
        %1732 = vmatpush1.bf16.msra.mxu0 %v1473
        %1733 = vmatprep.subr.bf16.mxu0 0
        %1734 = vmatpush1.bf16.msra.mxu0 %v1474
        %1735 = vmatprep.subr.bf16.mxu0 0
        %1736 = vmatpush1.bf16.msra.mxu0 %v1475
        %1737 = vmatprep.subr.bf16.mxu0 0
        %1738 = vmatpush1.bf16.msra.mxu0 %v1476
        %1739 = vmatprep.subr.bf16.mxu0 0
        %1740 = vmatpush1.bf16.msra.mxu0 %v1477
        %1741 = vmatprep.subr.bf16.mxu0 0
        %1742 = vmatpush1.bf16.msra.mxu0 %v1478
        %1743 = vmatprep.subr.bf16.mxu0 0
        %1744 = vmatpush1.bf16.msra.mxu0 %v1479
        %1745 = vmatprep.subr.bf16.mxu0 0
        %1746 = vmatpush1.bf16.msra.mxu0 %v1480
        %1747 = vmatprep.subr.bf16.mxu0 0
        %1748 = vmatpush1.bf16.msra.mxu0 %v1481
        %1749 = vmatprep.subr.bf16.mxu0 0
        %1750 = vmatpush1.bf16.msra.mxu0 %v1482
        %1751 = vmatprep.subr.bf16.mxu0 0
        %1752 = vmatpush1.bf16.msra.mxu0 %v1483
        %1753 = vmatprep.subr.bf16.mxu0 0
        %1754 = vmatpush1.bf16.msra.mxu0 %v1484
        %1755 = vmatprep.subr.bf16.mxu0 0
        %1756 = vmatpush1.bf16.msra.mxu0 %v1485
        %1757 = vmatprep.subr.bf16.mxu0 0
        %1758 = vmatpush1.bf16.msra.mxu0 %v1486
        %1759 = vmatprep.subr.bf16.mxu0 0
        %1760 = vmatpush1.bf16.msra.mxu0 %v1487
        %1761 = vmatprep.subr.bf16.mxu0 0
        %1762 = vmatpush1.bf16.msra.mxu0 %v1488
        %1763 = vmatprep.mubr.bf16.mxu0 %v1103
        %1764 = vmatmul.mubr.bf16.gmra.mrb[0].mxu0 %v1102
        %v1765 = vpop.f32.mrb[0].mxu0
        %v1766 = vadd.f32 %v1669, %v1765
        %v1767 = vpop.f32.mrb[0].mxu0
        %v1768 = vpop.f32.mrb[0].mxu0
        %v1769 = vadd.f32 %v1672, %v1768
        %v1770 = vpop.f32.mrb[0].mxu0
        %1771 = vmatprep.mubr.bf16.mxu0 %v1109
        %1772 = vmatmul.mubr.bf16.gmra.mrb[0].mxu0 %v1108
        %v1773 = vpop.f32.mrb[0].mxu0
        %v1774 = vadd.f32 %v1677, %v1773
        %v1775 = vpop.f32.mrb[0].mxu0
        %v1776 = vpop.f32.mrb[0].mxu0
        %v1777 = vadd.f32 %v1680, %v1776
        %v1778 = vpop.f32.mrb[0].mxu0
        %1779 = vmatprep.mubr.bf16.mxu0 %v1115
        %1780 = vmatmul.mubr.bf16.gmra.mrb[0].mxu0 %v1114
        %v1781 = vpop.f32.mrb[0].mxu0
        %v1782 = vadd.f32 %v1685, %v1781
        %v1783 = vpop.f32.mrb[0].mxu0
        %v1784 = vpop.f32.mrb[0].mxu0
        %v1785 = vadd.f32 %v1688, %v1784
        %v1786 = vpop.f32.mrb[0].mxu0
        %1787 = vmatprep.mubr.bf16.mxu0 %v1121
        %1788 = vmatmul.mubr.bf16.gmra.mrb[0].mxu0 %v1120
        %v1789 = vpop.f32.mrb[0].mxu0
        %v1790 = vadd.f32 %v1693, %v1789
        %v1791 = vpop.f32.mrb[0].mxu0
        %v1792 = vpop.f32.mrb[0].mxu0
        %v1793 = vadd.f32 %v1696, %v1792
        %v1794 = vpop.f32.mrb[0].mxu0
        %1795 = vmatprep.mubr.bf16.mxu0 %v1127
        %1796 = vmatmul.mubr.bf16.gmra.mrb[0].mxu0 %v1126
        %v1797 = vpop.f32.mrb[0].mxu0
        %v1798 = vadd.f32 %v1701, %v1797
        %v1799 = vpop.f32.mrb[0].mxu0
        %v1800 = vpop.f32.mrb[0].mxu0
        %v1801 = vadd.f32 %v1704, %v1800
        %v1802 = vpop.f32.mrb[0].mxu0
        %1803 = vmatprep.mubr.bf16.mxu0 %v1133
        %1804 = vmatmul.mubr.bf16.gmra.mrb[0].mxu0 %v1132
        %v1805 = vpop.f32.mrb[0].mxu0
        %v1806 = vadd.f32 %v1709, %v1805
        %v1807 = vpop.f32.mrb[0].mxu0
        %v1808 = vpop.f32.mrb[0].mxu0
        %v1809 = vadd.f32 %v1712, %v1808
        %v1810 = vpop.f32.mrb[0].mxu0
        %1811 = vmatprep.mubr.bf16.mxu0 %v1139
        %1812 = vmatmul.mubr.bf16.gmra.mrb[0].mxu0 %v1138
        %v1813 = vpop.f32.mrb[0].mxu0
        %v1814 = vadd.f32 %v1717, %v1813
        %v1815 = vpop.f32.mrb[0].mxu0
        %v1816 = vpop.f32.mrb[0].mxu0
        %v1817 = vadd.f32 %v1720, %v1816
        %v1818 = vpop.f32.mrb[0].mxu0
        %1819 = vmatprep.mubr.bf16.mxu0 %v1145
        %1820 = vmatmul.mubr.bf16.gmra.mrb[0].mxu0 %v1144
        %v1821 = vpop.f32.mrb[0].mxu0
        %v1822 = vadd.f32 %v1725, %v1821
        %v1823 = vpop.f32.mrb[0].mxu0
        %v1824 = vpop.f32.mrb[0].mxu0
        %v1825 = vadd.f32 %v1728, %v1824
        %v1826 = vpop.f32.mrb[0].mxu0
        %1827 = vdwg.mxu0
        %v1828 = vmax.f32 %v1766, 0.0
        %v1829 = vmax.f32 %v1769, 0.0
        %v1830 = vmax.f32 %v1774, 0.0
        %v1831 = vmax.f32 %v1777, 0.0
        %v1832 = vmax.f32 %v1782, 0.0
        %v1833 = vmax.f32 %v1785, 0.0
        %v1834 = vmax.f32 %v1790, 0.0
        %v1835 = vmax.f32 %v1793, 0.0
        %v1836 = vmax.f32 %v1798, 0.0
        %v1837 = vmax.f32 %v1801, 0.0
        %v1838 = vmax.f32 %v1806, 0.0
        %v1839 = vmax.f32 %v1809, 0.0
        %v1840 = vmax.f32 %v1814, 0.0
        %v1841 = vmax.f32 %v1817, 0.0
        %v1842 = vmax.f32 %v1822, 0.0
        %v1843 = vmax.f32 %v1825, 0.0
        %v1844 = vpack.c.bf16 %v1829, %v1828
        %v1845 = vpack.c.bf16 %v1831, %v1830
        %v1846 = vpack.c.bf16 %v1833, %v1832
        %v1847 = vpack.c.bf16 %v1835, %v1834
        %v1848 = vpack.c.bf16 %v1837, %v1836
        %v1849 = vpack.c.bf16 %v1839, %v1838
        %v1850 = vpack.c.bf16 %v1841, %v1840
        %v1851 = vpack.c.bf16 %v1843, %v1842
        %v1852 = vld [vmem:[%s3] sm:$0xff]
        %v1853 = vld [vmem:[%s3 + $0x8] sm:$0xff]
        %v1854 = vld [vmem:[%s3 + $0x10] sm:$0xff]
        %v1855 = vld [vmem:[%s3 + $0x18] sm:$0xff]
        %v1856 = vld [vmem:[%s3 + $0x20] sm:$0xff]
        %v1857 = vld [vmem:[%s3 + $0x28] sm:$0xff]
        %v1858 = vld [vmem:[%s3 + $0x30] sm:$0xff]
        %v1859 = vld [vmem:[%s3 + $0x38] sm:$0xff]
        %v1860 = vld [vmem:[%s3 + $0x40] sm:$0xff]
        %v1861 = vld [vmem:[%s3 + $0x48] sm:$0xff]
        %v1862 = vld [vmem:[%s3 + $0x50] sm:$0xff]
        %v1863 = vld [vmem:[%s3 + $0x58] sm:$0xff]
        %v1864 = vld [vmem:[%s3 + $0x60] sm:$0xff]
        %v1865 = vld [vmem:[%s3 + $0x68] sm:$0xff]
        %v1866 = vld [vmem:[%s3 + $0x70] sm:$0xff]
        %v1867 = vld [vmem:[%s3 + $0x78] sm:$0xff]
        %v1868 = vld [vmem:[%s4] sm:$0x3]
        %v1870 = vlaneseq
        %v1871 = vshrl.u32 %v1870, 7
        %v1872 = vsub.s32 0, %v1871
        %v1873 = vrot.slane %v1868, %v1872
        %v1874 = vlaneseq
        %v1875 = vshrl.u32 %v1874, 7
        %v1876 = vsub.s32 1, %v1875
        %v1877 = vrot.slane %v1868, %v1876
        %v1896 = vunpack.c.l.b16 %v1852
        %v1897 = vunpack.c.h.b16 %v1852
        %v1898 = vunpack.c.l.b16 %v1853
        %v1899 = vunpack.c.h.b16 %v1853
        %v1900 = vunpack.c.l.b16 %v1854
        %v1901 = vunpack.c.h.b16 %v1854
        %v1902 = vunpack.c.l.b16 %v1855
        %v1903 = vunpack.c.h.b16 %v1855
        %v1904 = vunpack.c.l.b16 %v1856
        %v1905 = vunpack.c.h.b16 %v1856
        %v1906 = vunpack.c.l.b16 %v1857
        %v1907 = vunpack.c.h.b16 %v1857
        %v1908 = vunpack.c.l.b16 %v1858
        %v1909 = vunpack.c.h.b16 %v1858
        %v1910 = vunpack.c.l.b16 %v1859
        %v1911 = vunpack.c.h.b16 %v1859
        %v1912 = vunpack.c.l.b16 %v1860
        %v1913 = vunpack.c.h.b16 %v1860
        %v1914 = vunpack.c.l.b16 %v1861
        %v1915 = vunpack.c.h.b16 %v1861
        %v1916 = vunpack.c.l.b16 %v1862
        %v1917 = vunpack.c.h.b16 %v1862
        %v1918 = vunpack.c.l.b16 %v1863
        %v1919 = vunpack.c.h.b16 %v1863
        %v1920 = vunpack.c.l.b16 %v1864
        %v1921 = vunpack.c.h.b16 %v1864
        %v1922 = vunpack.c.l.b16 %v1865
        %v1923 = vunpack.c.h.b16 %v1865
        %v1924 = vunpack.c.l.b16 %v1866
        %v1925 = vunpack.c.h.b16 %v1866
        %v1926 = vunpack.c.l.b16 %v1867
        %v1927 = vunpack.c.h.b16 %v1867
        %v1928 = vpack.c.b16 %v1898, %v1896
        %v1929 = vpack.c.b16 %v1899, %v1897
        %v1930 = vpack.c.b16 %v1902, %v1900
        %v1931 = vpack.c.b16 %v1903, %v1901
        %v1932 = vpack.c.b16 %v1906, %v1904
        %v1933 = vpack.c.b16 %v1907, %v1905
        %v1934 = vpack.c.b16 %v1910, %v1908
        %v1935 = vpack.c.b16 %v1911, %v1909
        %v1936 = vpack.c.b16 %v1914, %v1912
        %v1937 = vpack.c.b16 %v1915, %v1913
        %v1938 = vpack.c.b16 %v1918, %v1916
        %v1939 = vpack.c.b16 %v1919, %v1917
        %v1940 = vpack.c.b16 %v1922, %v1920
        %v1941 = vpack.c.b16 %v1923, %v1921
        %v1942 = vpack.c.b16 %v1926, %v1924
        %v1943 = vpack.c.b16 %v1927, %v1925
        %1960 = vmatprep.subr.bf16.mxu0 %v1929
        %1961 = vmatpush1.bf16.msra.mxu0 %v1928
        %1962 = vmatprep.subr.bf16.mxu0 %v1931
        %1963 = vmatpush1.bf16.msra.mxu0 %v1930
        %1964 = vmatprep.subr.bf16.mxu0 %v1933
        %1965 = vmatpush1.bf16.msra.mxu0 %v1932
        %1966 = vmatprep.subr.bf16.mxu0 %v1935
        %1967 = vmatpush1.bf16.msra.mxu0 %v1934
        %1968 = vmatprep.subr.bf16.mxu0 %v1937
        %1969 = vmatpush1.bf16.msra.mxu0 %v1936
        %1970 = vmatprep.subr.bf16.mxu0 %v1939
        %1971 = vmatpush1.bf16.msra.mxu0 %v1938
        %1972 = vmatprep.subr.bf16.mxu0 %v1941
        %1973 = vmatpush1.bf16.msra.mxu0 %v1940
        %1974 = vmatprep.subr.bf16.mxu0 %v1943
        %1975 = vmatpush1.bf16.msra.mxu0 %v1942
        %1976 = vmatprep.subr.bf16.mxu0 0
        %1977 = vmatpush1.bf16.msra.mxu0 0
        %1978 = vmatprep.subr.bf16.mxu0 0
        %1979 = vmatpush1.bf16.msra.mxu0 0
        %1980 = vmatprep.subr.bf16.mxu0 0
        %1981 = vmatpush1.bf16.msra.mxu0 0
        %1982 = vmatprep.subr.bf16.mxu0 0
        %1983 = vmatpush1.bf16.msra.mxu0 0
        %1984 = vmatprep.subr.bf16.mxu0 0
        %1985 = vmatpush1.bf16.msra.mxu0 0
        %1986 = vmatprep.subr.bf16.mxu0 0
        %1987 = vmatpush1.bf16.msra.mxu0 0
        %1988 = vmatprep.subr.bf16.mxu0 0
        %1989 = vmatpush1.bf16.msra.mxu0 0
        %1990 = vmatprep.subr.bf16.mxu0 0
        %1991 = vmatpush1.bf16.msra.mxu0 0
        %1992 = vmatprep.mubr.bf16.mxu0 0
        %1993 = vmatmul.mubr.bf16.gmra.mrb[0].mxu0 %v1844
        %v1994 = vpop.f32.mrb[0].mxu0
        %v1995 = vadd.f32 %v1873, %v1994
        %v1996 = vpop.f32.mrb[0].mxu0
        %v1997 = vadd.f32 %v1877, %v1996
        %v1998 = vpop.f32.mrb[0].mxu0
        %v1999 = vadd.f32 %v1873, %v1998
        %v2000 = vpop.f32.mrb[0].mxu0
        %v2001 = vadd.f32 %v1877, %v2000
        %2002 = vmatprep.mubr.bf16.mxu0 0
        %2003 = vmatmul.mubr.bf16.gmra.mrb[0].mxu0 %v1845
        %v2004 = vpop.f32.mrb[0].mxu0
        %v2005 = vadd.f32 %v1873, %v2004
        %v2006 = vpop.f32.mrb[0].mxu0
        %v2007 = vadd.f32 %v1877, %v2006
        %v2008 = vpop.f32.mrb[0].mxu0
        %v2009 = vadd.f32 %v1873, %v2008
        %v2010 = vpop.f32.mrb[0].mxu0
        %v2011 = vadd.f32 %v1877, %v2010
        %2012 = vmatprep.mubr.bf16.mxu0 0
        %2013 = vmatmul.mubr.bf16.gmra.mrb[0].mxu0 %v1846
        %v2014 = vpop.f32.mrb[0].mxu0
        %v2015 = vadd.f32 %v1873, %v2014
        %v2016 = vpop.f32.mrb[0].mxu0
        %v2017 = vadd.f32 %v1877, %v2016
        %v2018 = vpop.f32.mrb[0].mxu0
        %v2019 = vadd.f32 %v1873, %v2018
        %v2020 = vpop.f32.mrb[0].mxu0
        %v2021 = vadd.f32 %v1877, %v2020
        %2022 = vmatprep.mubr.bf16.mxu0 0
        %2023 = vmatmul.mubr.bf16.gmra.mrb[0].mxu0 %v1847
        %v2024 = vpop.f32.mrb[0].mxu0
        %v2025 = vadd.f32 %v1873, %v2024
        %v2026 = vpop.f32.mrb[0].mxu0
        %v2027 = vadd.f32 %v1877, %v2026
        %v2028 = vpop.f32.mrb[0].mxu0
        %v2029 = vadd.f32 %v1873, %v2028
        %v2030 = vpop.f32.mrb[0].mxu0
        %v2031 = vadd.f32 %v1877, %v2030
        %2032 = vmatprep.mubr.bf16.mxu0 0
        %2033 = vmatmul.mubr.bf16.gmra.mrb[0].mxu0 %v1848
        %v2034 = vpop.f32.mrb[0].mxu0
        %v2035 = vadd.f32 %v1873, %v2034
        %v2036 = vpop.f32.mrb[0].mxu0
        %v2037 = vadd.f32 %v1877, %v2036
        %v2038 = vpop.f32.mrb[0].mxu0
        %v2039 = vadd.f32 %v1873, %v2038
        %v2040 = vpop.f32.mrb[0].mxu0
        %v2041 = vadd.f32 %v1877, %v2040
        %2042 = vmatprep.mubr.bf16.mxu0 0
        %2043 = vmatmul.mubr.bf16.gmra.mrb[0].mxu0 %v1849
        %v2044 = vpop.f32.mrb[0].mxu0
        %v2045 = vadd.f32 %v1873, %v2044
        %v2046 = vpop.f32.mrb[0].mxu0
        %v2047 = vadd.f32 %v1877, %v2046
        %v2048 = vpop.f32.mrb[0].mxu0
        %v2049 = vadd.f32 %v1873, %v2048
        %v2050 = vpop.f32.mrb[0].mxu0
        %v2051 = vadd.f32 %v1877, %v2050
        %2052 = vmatprep.mubr.bf16.mxu0 0
        %2053 = vmatmul.mubr.bf16.gmra.mrb[0].mxu0 %v1850
        %v2054 = vpop.f32.mrb[0].mxu0
        %v2055 = vadd.f32 %v1873, %v2054
        %v2056 = vpop.f32.mrb[0].mxu0
        %v2057 = vadd.f32 %v1877, %v2056
        %v2058 = vpop.f32.mrb[0].mxu0
        %v2059 = vadd.f32 %v1873, %v2058
        %v2060 = vpop.f32.mrb[0].mxu0
        %v2061 = vadd.f32 %v1877, %v2060
        %2062 = vmatprep.mubr.bf16.mxu0 0
        %2063 = vmatmul.mubr.bf16.gmra.mrb[0].mxu0 %v1851
        %v2064 = vpop.f32.mrb[0].mxu0
        %v2065 = vadd.f32 %v1873, %v2064
        %v2066 = vpop.f32.mrb[0].mxu0
        %v2067 = vadd.f32 %v1877, %v2066
        %v2068 = vpop.f32.mrb[0].mxu0
        %v2069 = vadd.f32 %v1873, %v2068
        %v2070 = vpop.f32.mrb[0].mxu0
        %v2071 = vadd.f32 %v1877, %v2070
        %2072 = vdwg.mxu0
        %v2073 = vpack.c.bf16 %v1999, %v1995
        %v2074 = vpack.c.bf16 %v2001, %v1997
        %v2075 = vpack.c.bf16 %v2009, %v2005
        %v2076 = vpack.c.bf16 %v2011, %v2007
        %v2077 = vpack.c.bf16 %v2019, %v2015
        %v2078 = vpack.c.bf16 %v2021, %v2017
        %v2079 = vpack.c.bf16 %v2029, %v2025
        %v2080 = vpack.c.bf16 %v2031, %v2027
        %v2081 = vpack.c.bf16 %v2039, %v2035
        %v2082 = vpack.c.bf16 %v2041, %v2037
        %v2083 = vpack.c.bf16 %v2049, %v2045
        %v2084 = vpack.c.bf16 %v2051, %v2047
        %v2085 = vpack.c.bf16 %v2059, %v2055
        %v2086 = vpack.c.bf16 %v2061, %v2057
        %v2087 = vpack.c.bf16 %v2069, %v2065
        %v2088 = vpack.c.bf16 %v2071, %v2067
        %v2105 = vunpack.c.l.b16 %v2073
        %v2106 = vunpack.c.l.b16 %v2074
        %v2107 = vunpack.c.h.b16 %v2073
        %v2108 = vunpack.c.h.b16 %v2074
        %v2109 = vunpack.c.l.b16 %v2075
        %v2110 = vunpack.c.l.b16 %v2076
        %v2111 = vunpack.c.h.b16 %v2075
        %v2112 = vunpack.c.h.b16 %v2076
        %v2113 = vunpack.c.l.b16 %v2077
        %v2114 = vunpack.c.l.b16 %v2078
        %v2115 = vunpack.c.h.b16 %v2077
        %v2116 = vunpack.c.h.b16 %v2078
        %v2117 = vunpack.c.l.b16 %v2079
        %v2118 = vunpack.c.l.b16 %v2080
        %v2119 = vunpack.c.h.b16 %v2079
        %v2120 = vunpack.c.h.b16 %v2080
        %v2121 = vunpack.c.l.b16 %v2081
        %v2122 = vunpack.c.l.b16 %v2082
        %v2123 = vunpack.c.h.b16 %v2081
        %v2124 = vunpack.c.h.b16 %v2082
        %v2125 = vunpack.c.l.b16 %v2083
        %v2126 = vunpack.c.l.b16 %v2084
        %v2127 = vunpack.c.h.b16 %v2083
        %v2128 = vunpack.c.h.b16 %v2084
        %v2129 = vunpack.c.l.b16 %v2085
        %v2130 = vunpack.c.l.b16 %v2086
        %v2131 = vunpack.c.h.b16 %v2085
        %v2132 = vunpack.c.h.b16 %v2086
        %v2133 = vunpack.c.l.b16 %v2087
        %v2134 = vunpack.c.l.b16 %v2088
        %v2135 = vunpack.c.h.b16 %v2087
        %v2136 = vunpack.c.h.b16 %v2088
        %v2137 = vpack.c.b16 %v2106, %v2105
        %v2138 = vpack.c.b16 %v2108, %v2107
        %v2139 = vpack.c.b16 %v2110, %v2109
        %v2140 = vpack.c.b16 %v2112, %v2111
        %v2141 = vpack.c.b16 %v2114, %v2113
        %v2142 = vpack.c.b16 %v2116, %v2115
        %v2143 = vpack.c.b16 %v2118, %v2117
        %v2144 = vpack.c.b16 %v2120, %v2119
        %v2145 = vpack.c.b16 %v2122, %v2121
        %v2146 = vpack.c.b16 %v2124, %v2123
        %v2147 = vpack.c.b16 %v2126, %v2125
        %v2148 = vpack.c.b16 %v2128, %v2127
        %v2149 = vpack.c.b16 %v2130, %v2129
        %v2150 = vpack.c.b16 %v2132, %v2131
        %v2151 = vpack.c.b16 %v2134, %v2133
        %v2152 = vpack.c.b16 %v2136, %v2135
        %2169 = vst [vmem:[%s218] sm:$0xff] %v2137
        %2170 = vst [vmem:[%s218 + $0x8] sm:$0xff] %v2138
        %2171 = vst [vmem:[%s218 + $0x10] sm:$0xff] %v2139
        %2172 = vst [vmem:[%s218 + $0x18] sm:$0xff] %v2140
        %2173 = vst [vmem:[%s218 + $0x20] sm:$0xff] %v2141
        %2174 = vst [vmem:[%s218 + $0x28] sm:$0xff] %v2142
        %2175 = vst [vmem:[%s218 + $0x30] sm:$0xff] %v2143
        %2176 = vst [vmem:[%s218 + $0x38] sm:$0xff] %v2144
        %2177 = vst [vmem:[%s218 + $0x40] sm:$0xff] %v2145
        %2178 = vst [vmem:[%s218 + $0x48] sm:$0xff] %v2146
        %2179 = vst [vmem:[%s218 + $0x50] sm:$0xff] %v2147
        %2180 = vst [vmem:[%s218 + $0x58] sm:$0xff] %v2148
        %2181 = vst [vmem:[%s218 + $0x60] sm:$0xff] %v2149
        %2182 = vst [vmem:[%s218 + $0x68] sm:$0xff] %v2150
        %2183 = vst [vmem:[%s218 + $0x70] sm:$0xff] %v2151
        %2184 = vst [vmem:[%s218 + $0x78] sm:$0xff] %v2152
        %s2185 = sand.u32 %s137, 1
        %s2186 = scalar_lea.sflag [#allocation3], %s2185
        %s2187 = sand.u32 %s137, 1
        %s2188 = smul.addr %s2187, 128
        %s2189 = scalar_lea.vmem [#allocation2], %s2188
        // Predicated region
        $region41: #{tpu_custom_call.1} parent=39 // pred_check
          %p2190 = pneg %p147
        $region42: #{tpu_custom_call.1} parent=39 // pred_check_branch
          %2192 = sbr.rel (%p2190) target = $region44
        $region43: #{tpu_custom_call.1} parent=39 // pred_region
          %s2193 = smul.u32 16, %s19
          %s2195 = ssub.s32 2048, 2048
          %2196 = vsyncadd %s2186, %s2195
          %s2197 = smul.addr %s2193, 2
          %s2198 = smul.addr %s2197, 64
          %s2199 = scalar_lea.hbm %s5, %s2198
          %s2200 = sshll.u32 %s2189, 4
          %s2201 = int_to_ptr.vmem [resolvable:$true] %s2200
          %2206 = dma.vmem_to_hbm [thread:$0]  %s2201, 2048, %s2199, %s2186, 128, 128, 8
        $region44: #{tpu_custom_call.1} parent=39 // pred_fallthru
          _
      $region40: #{tpu_custom_call.1} parent=5 // pred_fallthru
        _
      %p2207 = scmp.le.s32.totalorder 2, %s14
      // Predicated region
      $region45: #{tpu_custom_call.1} parent=5 // pred_check
        %p2208 = pneg %p2207
      $region46: #{tpu_custom_call.1} parent=5 // pred_check_branch
        %2210 = sbr.rel (%p2208) target = $region48
      $region47: #{tpu_custom_call.1} parent=5 // pred_region
        %s2211 = ssub.s32 %s14, 2
        // Predicated region
        $region49: #{tpu_custom_call.1} parent=47 // pred_check
          %p2212 = pneg %p153
        $region50: #{tpu_custom_call.1} parent=47 // pred_check_branch
          %2214 = sbr.rel (%p2212) target = $region52
        $region51: #{tpu_custom_call.1} parent=47 // pred_region
          %s2215 = sand.u32 %s138, 1
          %s2216 = scalar_lea.sflag [#allocation3], %s2215
          %s2217 = sand.u32 %s138, 1
          %s2218 = smul.addr %s2217, 128
          %s2219 = scalar_lea.vmem [#allocation2], %s2218
          %2220 = dma.done %s2216, 2048
        $region52: #{tpu_custom_call.1} parent=47 // pred_fallthru
          _
      $region48: #{tpu_custom_call.1} parent=5 // pred_fallthru
        _
    $region6: #{tpu_custom_call.1} parent=1 // loop_footer
      %s18 = sadd.s32 1, %s14
    $region7: #{tpu_custom_call.1} parent=1 // loop_footer_branch
      %13 = sbr.rel target = $region3
    $region8: #{tpu_custom_call.1} parent=1 // loop_exit
      _
    %2221 = vsyncpa [#allocation3], 1
    %s2222 = scalar_lea.sflag [#allocation3], 1
    %2223 = vsyncpa %s2222, 1

</llo_original>
